<compile_context>
chip_gen: v6e
topology: v6e:2x2x1
jax: 0.10.0
libtpu: 0.0.40
codegen_flags: <defaults>
</compile_context>

<pallas_src>
import math
import functools

import jax
import jax.numpy as jnp
import numpy as np
from jax import lax
from jax.experimental import pallas as pl
from jax.experimental.pallas import tpu as pltpu


def _mm(a, b):
    """Matmul with bf16 operands, f32 accumulation (MXU friendly)."""
    return jnp.dot(a.astype(jnp.bfloat16), b.astype(jnp.bfloat16),
                   preferred_element_type=jnp.float32)


def _mm_t(a, b):
    """a @ b.T with bf16 operands, f32 accumulation."""
    return lax.dot_general(a.astype(jnp.bfloat16), b.astype(jnp.bfloat16),
                           (((1,), (1,)), ((), ())),
                           preferred_element_type=jnp.float32)


def _mm_f32(a, b):
    """f32 matmul (used for exact one-hot gathers / block means)."""
    return jnp.dot(a, b, preferred_element_type=jnp.float32)


def nsa_kernel(q_ref, k_ref, v_ref, idx_ref,
               wg_ref, bg_ref,
               cw1_ref, cb1_ref, cw2_ref, cb2_ref, pos_ref,
               wq_ref, bq_ref, wk_ref, bk_ref, wv_ref, bv_ref,
               out_ref,
               *, num_heads, block_size, window_size):
    f32 = jnp.float32
    q = q_ref[0]                                   # (T, H) f32
    k = k_ref[0]
    v = v_ref[0]
    T, H = q.shape
    nh = num_heads

    # ---------------- gate path: sigmoid(q @ Wg + bg), chunk into 3 ---------
    gate = jax.nn.sigmoid(_mm(q, wg_ref[...]) + bg_ref[...])    # (T, 3*nh) f32
    g_comp = gate[:, 0 * nh:1 * nh]
    g_sel = gate[:, 1 * nh:2 * nh]
    g_win = gate[:, 2 * nh:3 * nh]

    # ---------------- compression path (TokenCompression) -------------------
    # block means as a one-hot matmul; mean(k_block + pos) = mean(k_block)+mean(pos)
    n_blocks = T // block_size
    t_b = lax.broadcasted_iota(jnp.int32, (n_blocks, T), 1)
    b_b = lax.broadcasted_iota(jnp.int32, (n_blocks, T), 0)
    blk_onehot = ((t_b >= b_b * block_size) &
                  (t_b < (b_b + 1) * block_size)).astype(f32)   # (n_blocks, T)
    k_mean = _mm_f32(blk_onehot, k) * (1.0 / block_size)        # (n_blocks, H)
    pos_mean = jnp.mean(pos_ref[...], axis=0, keepdims=True)    # (1, H)
    h_c = jax.nn.sigmoid(_mm(k_mean + pos_mean, cw1_ref[...]) + cb1_ref[...])
    compressed = _mm(h_c, cw2_ref[...]) + cb2_ref[...]          # (n_blocks, H)

    # ---------------- selection path (TokenSelection) -----------------------
    # top-k indices were computed in the wrapper; gather rows via one-hot MXU.
    idx = idx_ref[0]                                            # (n_sel, 1) int32
    n_sel = idx.shape[0]
    t_s = lax.broadcasted_iota(jnp.int32, (n_sel, T), 1)
    sel_onehot = (t_s == idx).astype(f32)                       # (n_sel, T)
    selected = _mm_f32(sel_onehot, k)                           # (n_sel, H)

    # ---------------- sliding-window path: batched banded attention ---------
    Qa = _mm(q, wq_ref[...]) + bq_ref[...]                      # (T, H)
    Ka = _mm(k, wk_ref[...]) + bk_ref[...]
    Va = _mm(v, wv_ref[...]) + bv_ref[...]
    n_win = (T + window_size - 1) // window_size
    w_i = lax.broadcasted_iota(jnp.int32, (n_win, T), 0)
    t_w = lax.broadcasted_iota(jnp.int32, (n_win, T), 1)
    centers = w_i * window_size
    q_onehot = (t_w == centers).astype(f32)                     # (n_win, T)
    Qw = _mm_f32(q_onehot, Qa)                                  # (n_win, H)
    scores = _mm_t(Qw, Ka) * (1.0 / math.sqrt(H))               # (n_win, T)
    w_start = jnp.maximum(centers - window_size // 2, 0)
    w_end = jnp.minimum(centers + window_size // 2 + 1, T)
    valid = (t_w >= w_start) & (t_w < w_end)
    scores = jnp.where(valid, scores, -1e30)
    m = jnp.max(scores, axis=-1, keepdims=True)
    e = jnp.exp(scores - m)
    p = e * pl.reciprocal(jnp.sum(e, axis=-1, keepdims=True), approx=True)
    window_out = _mm(p, Va)                                     # (n_win, H)

    # ---------------- gated combine: single lane-dense store ----------------
    out_ref[0] = g_comp * compressed + g_sel * selected + g_win * window_out


def _broadcast_len(*lens):
    out = 1
    for l in lens:
        if l != 1:
            if out != 1 and out != l:
                raise ValueError("path lengths %s are not broadcast-compatible" % (lens,))
            out = l
    return out


def native_sparse_attention(q, k, v, params, *, num_heads, block_size, top_k, window_size):
    B, T, H = q.shape
    if T % block_size != 0:
        raise ValueError("T must be divisible by block_size")
    n_blocks = T // block_size
    n_sel = int(T * top_k)
    if n_sel < 1:
        raise ValueError("int(T * top_k) must be >= 1")
    n_win = len(range(0, T, window_size))
    T_out = _broadcast_len(T, n_blocks, n_sel, n_win)

    # Importance MLP + top-k (data-dependent global sort) in the wrapper,
    # mirroring the reference module exactly; the kernel only gathers.
    imp = (jax.nn.relu(k @ params['sw1'].T + params['sb1'])
           @ params['sw2'].T + params['sb2'])[..., 0]           # (B, T) f32
    _, sel_idx = jax.lax.top_k(imp, n_sel)                      # (B, n_sel)
    sel_idx = sel_idx.astype(jnp.int32).reshape(B, n_sel, 1)

    # kernel-side parameter layout: bf16 transposed weights, f32 row biases
    def wt(name):
        return jnp.transpose(params[name]).astype(jnp.bfloat16)  # (in, out)

    def brow(name):
        return params[name].reshape(1, -1).astype(jnp.float32)   # (1, out)

    weight_args = [
        wt('wg'), brow('bg'),
        wt('cw1'), brow('cb1'), wt('cw2'), brow('cb2'),
        params['pos'].astype(jnp.float32),
        wt('wq'), brow('bq'), wt('wk'), brow('bk'), wt('wv'), brow('bv'),
    ]

    def full_spec(arr):
        shape = arr.shape
        return pl.BlockSpec(shape, lambda b, _s=shape: (0,) * len(_s))

    batched = pl.BlockSpec((1, T, H), lambda b: (b, 0, 0))
    idx_spec = pl.BlockSpec((1, n_sel, 1), lambda b: (b, 0, 0))
    out_spec = pl.BlockSpec((1, T_out, H), lambda b: (b, 0, 0))

    kernel = functools.partial(
        nsa_kernel, num_heads=num_heads, block_size=block_size,
        window_size=window_size)

    return pl.pallas_call(
        kernel,
        out_shape=jax.ShapeDtypeStruct((B, T_out, H), jnp.float32),
        grid=(B,),
        in_specs=[batched, batched, batched, idx_spec]
                 + [full_spec(w) for w in weight_args],
        out_specs=out_spec,
        compiler_params=pltpu.CompilerParams(
            dimension_semantics=("parallel",),
            vmem_limit_bytes=32 * 1024 * 1024),
    )(q, k, v, sel_idx, *weight_args)


# ------------------------- pure-JAX reference ------------------------------
def reference(q, k, v, p, *, num_heads, block_size, top_k, window_size):
    B, T, H = q.shape
    nh = num_heads
    gate = jax.nn.sigmoid(q @ p['wg'].T + p['bg'])
    g_comp, g_sel, g_win = gate[..., :nh], gate[..., nh:2 * nh], gate[..., 2 * nh:]

    kb = k.reshape(B, -1, block_size, H) + p['pos'][None, None]
    comp = jax.nn.sigmoid(kb.mean(axis=-2) @ p['cw1'].T + p['cb1']) @ p['cw2'].T + p['cb2']

    imp = (jax.nn.relu(k @ p['sw1'].T + p['sb1']) @ p['sw2'].T + p['sb2'])[..., 0]
    n_sel = int(T * top_k)
    _, idx = jax.lax.top_k(imp, n_sel)
    sel = jnp.take_along_axis(k, idx[..., None], axis=1)

    scale = 1.0 / math.sqrt(H)
    outs = []
    for i in range(0, T, window_size):
        s0 = max(0, i - window_size // 2)
        e0 = min(T, i + window_size // 2 + 1)
        Q = q[:, i:i + 1] @ p['wq'].T + p['bq']
        K = k[:, s0:e0] @ p['wk'].T + p['bk']
        V = v[:, s0:e0] @ p['wv'].T + p['bv']
        sc = jnp.einsum('bqh,bkh->bqk', Q, K) * scale
        w = jax.nn.softmax(sc, axis=-1)
        outs.append(jnp.einsum('bqk,bkh->bqh', w, V))
    win = jnp.concatenate(outs, axis=1)
    return g_comp * comp + g_sel * sel + g_win * win


# ------------------------- deterministic params ----------------------------
def init_params(key, hidden_size, num_heads, block_size):
    H = hidden_size
    keys = jax.random.split(key, 10)

    def lin(kk, out_f, in_f):
        k1, k2 = jax.random.split(kk)
        bound = 1.0 / math.sqrt(in_f)
        w = jax.random.uniform(k1, (out_f, in_f), jnp.float32, -bound, bound)
        b = jax.random.uniform(k2, (out_f,), jnp.float32, -bound, bound)
        return w, b

    p = {}
    p['wg'], p['bg'] = lin(keys[0], 3 * num_heads, H)
    p['cw1'], p['cb1'] = lin(keys[1], H, H)
    p['cw2'], p['cb2'] = lin(keys[2], H, H)
    p['pos'] = jax.random.normal(keys[3], (block_size, H), jnp.float32)
    p['sw1'], p['sb1'] = lin(keys[4], H, H)
    p['sw2'], p['sb2'] = lin(keys[5], 1, H)
    p['wq'], p['bq'] = lin(keys[6], H, H)
    p['wk'], p['bk'] = lin(keys[7], H, H)
    p['wv'], p['bv'] = lin(keys[8], H, H)
    return p


if __name__ == "__main__":
    key = jax.random.PRNGKey(0)
    B, T, H = 2, 8, 32
    kq, kk, kv, kp = jax.random.split(key, 4)
    q = jax.random.normal(kq, (B, T, H), jnp.float32)
    k = jax.random.normal(kk, (B, T, H), jnp.float32)
    v = jax.random.normal(kv, (B, T, H), jnp.float32)

    # Two hyper-parameter regimes in which the original PyTorch module's
    # broadcasting is well defined (per-token paths, and single-row paths).
    configs = [
        dict(num_heads=1, block_size=1, top_k=1.0, window_size=1),
        dict(num_heads=1, block_size=8, top_k=0.125, window_size=8),
    ]

    for cfg in configs:
        params = init_params(kp, H, cfg['num_heads'], cfg['block_size'])
        out = native_sparse_attention(q, k, v, params, **cfg)
        out = jax.block_until_ready(out)
        ref = reference(q, k, v, params, **cfg)
        # tolerance widened vs. pure-f32 because weight matmuls use bf16
        # operands (f32 accumulation) inside the kernel.
        np.testing.assert_allclose(np.asarray(out), np.asarray(ref),
                                   rtol=2e-2, atol=2e-2)

    print("KERNEL_OK")
</pallas_src>

<mosaic_0001>
module attributes {stable_mosaic.version = 11 : i64} {
  func.func @nsa_kernel(%arg0: i32, %arg1: memref<1x8x32xf32, #tpu.memory_space<vmem>>, %arg2: memref<1x8x32xf32, #tpu.memory_space<vmem>>, %arg3: memref<1x8x32xf32, #tpu.memory_space<vmem>>, %arg4: memref<1x8x1xi32, #tpu.memory_space<vmem>>, %arg5: memref<32x3xbf16, #tpu.memory_space<vmem>>, %arg6: memref<1x3xf32, #tpu.memory_space<vmem>>, %arg7: memref<32x32xbf16, #tpu.memory_space<vmem>>, %arg8: memref<1x32xf32, #tpu.memory_space<vmem>>, %arg9: memref<32x32xbf16, #tpu.memory_space<vmem>>, %arg10: memref<1x32xf32, #tpu.memory_space<vmem>>, %arg11: memref<1x32xf32, #tpu.memory_space<vmem>>, %arg12: memref<32x32xbf16, #tpu.memory_space<vmem>>, %arg13: memref<1x32xf32, #tpu.memory_space<vmem>>, %arg14: memref<32x32xbf16, #tpu.memory_space<vmem>>, %arg15: memref<1x32xf32, #tpu.memory_space<vmem>>, %arg16: memref<32x32xbf16, #tpu.memory_space<vmem>>, %arg17: memref<1x32xf32, #tpu.memory_space<vmem>>, %arg18: memref<1x8x32xf32, #tpu.memory_space<vmem>>) attributes {dimension_semantics = [#tpu.dimension_semantics<parallel>], iteration_bounds = array<i64: 2>, scalar_prefetch = 0 : i64, scratch_operands = 0 : i64, tpu.core_type = #tpu.core_type<tc>, window_params = [{transform_indices = @transform_0, window_bounds = array<i64: 1, 8, 32>}, {transform_indices = @transform_1, window_bounds = array<i64: 1, 8, 32>}, {transform_indices = @transform_2, window_bounds = array<i64: 1, 8, 32>}, {transform_indices = @transform_3, window_bounds = array<i64: 1, 8, 1>}, {pipeline_mode = #tpu.pipeline_mode<synchronous>, transform_indices = @transform_4, window_bounds = array<i64: 32, 3>}, {pipeline_mode = #tpu.pipeline_mode<synchronous>, transform_indices = @transform_5, window_bounds = array<i64: 1, 3>}, {pipeline_mode = #tpu.pipeline_mode<synchronous>, transform_indices = @transform_6, window_bounds = array<i64: 32, 32>}, {pipeline_mode = #tpu.pipeline_mode<synchronous>, transform_indices = @transform_7, window_bounds = array<i64: 1, 32>}, {pipeline_mode = #tpu.pipeline_mode<synchronous>, transform_indices = @transform_8, window_bounds = array<i64: 32, 32>}, {pipeline_mode = #tpu.pipeline_mode<synchronous>, transform_indices = @transform_9, window_bounds = array<i64: 1, 32>}, {pipeline_mode = #tpu.pipeline_mode<synchronous>, transform_indices = @transform_10, window_bounds = array<i64: 1, 32>}, {pipeline_mode = #tpu.pipeline_mode<synchronous>, transform_indices = @transform_11, window_bounds = array<i64: 32, 32>}, {pipeline_mode = #tpu.pipeline_mode<synchronous>, transform_indices = @transform_12, window_bounds = array<i64: 1, 32>}, {pipeline_mode = #tpu.pipeline_mode<synchronous>, transform_indices = @transform_13, window_bounds = array<i64: 32, 32>}, {pipeline_mode = #tpu.pipeline_mode<synchronous>, transform_indices = @transform_14, window_bounds = array<i64: 1, 32>}, {pipeline_mode = #tpu.pipeline_mode<synchronous>, transform_indices = @transform_15, window_bounds = array<i64: 32, 32>}, {pipeline_mode = #tpu.pipeline_mode<synchronous>, transform_indices = @transform_16, window_bounds = array<i64: 1, 32>}, {transform_indices = @transform_17, window_bounds = array<i64: 1, 8, 32>}]} {
    %c0 = arith.constant 0 : index
    %c0_0 = arith.constant 0 : index
    %c0_1 = arith.constant 0 : index
    %0 = vector.load %arg1[%c0, %c0_0, %c0_1] : memref<1x8x32xf32, #tpu.memory_space<vmem>>, vector<1x8x32xf32>
    %1 = vector.shape_cast %0 : vector<1x8x32xf32> to vector<8x32xf32>
    %c0_2 = arith.constant 0 : index
    %c0_3 = arith.constant 0 : index
    %c0_4 = arith.constant 0 : index
    %2 = vector.load %arg2[%c0_2, %c0_3, %c0_4] : memref<1x8x32xf32, #tpu.memory_space<vmem>>, vector<1x8x32xf32>
    %3 = vector.shape_cast %2 : vector<1x8x32xf32> to vector<8x32xf32>
    %c0_5 = arith.constant 0 : index
    %c0_6 = arith.constant 0 : index
    %c0_7 = arith.constant 0 : index
    %4 = vector.load %arg3[%c0_5, %c0_6, %c0_7] : memref<1x8x32xf32, #tpu.memory_space<vmem>>, vector<1x8x32xf32>
    %5 = vector.shape_cast %4 : vector<1x8x32xf32> to vector<8x32xf32>
    %c0_8 = arith.constant 0 : index
    %c0_9 = arith.constant 0 : index
    %6 = vector.load %arg5[%c0_8, %c0_9] : memref<32x3xbf16, #tpu.memory_space<vmem>>, vector<32x3xbf16>
    %7 = arith.truncf %1 : vector<8x32xf32> to vector<8x32xbf16>
    %cst = arith.constant dense<0.000000e+00> : vector<8x3xf32>
    %8 = tpu.matmul %7, %6, %cst {dimension_numbers = #tpu.dot_dimension_numbers<[1], [0], [0], [1], [0, 0, 1, 1], [], []>} : vector<8x32xbf16>, vector<32x3xbf16>, vector<8x3xf32> -> vector<8x3xf32>
    %c0_10 = arith.constant 0 : index
    %c0_11 = arith.constant 0 : index
    %9 = vector.load %arg6[%c0_10, %c0_11] : memref<1x3xf32, #tpu.memory_space<vmem>>, vector<1x3xf32>
    %10 = vector.broadcast %9 : vector<1x3xf32> to vector<8x3xf32>
    %11 = arith.addf %8, %10 : vector<8x3xf32>
    %12 = arith.negf %11 : vector<8x3xf32>
    %13 = math.exp %12 : vector<8x3xf32>
    %cst_12 = arith.constant 1.000000e+00 : f32
    %14 = vector.broadcast %cst_12 : f32 to vector<8x3xf32>
    %15 = arith.addf %14, %13 : vector<8x3xf32>
    %16 = arith.divf %14, %15 : vector<8x3xf32>
    %17 = vector.extract_strided_slice %16 {offsets = [0, 0], sizes = [8, 1], strides = [1, 1]} : vector<8x3xf32> to vector<8x1xf32>
    %18 = vector.extract_strided_slice %16 {offsets = [0, 1], sizes = [8, 1], strides = [1, 1]} : vector<8x3xf32> to vector<8x1xf32>
    %19 = vector.extract_strided_slice %16 {offsets = [0, 2], sizes = [8, 1], strides = [1, 1]} : vector<8x3xf32> to vector<8x1xf32>
    %20 = tpu.iota {dimensions = array<i32: 1>} : vector<8x8xi32>
    %21 = tpu.iota {dimensions = array<i32: 0>} : vector<8x8xi32>
    %c1_i32 = arith.constant 1 : i32
    %22 = vector.broadcast %c1_i32 : i32 to vector<8x8xi32>
    %23 = arith.muli %21, %22 : vector<8x8xi32>
    %24 = arith.cmpi sge, %20, %23 : vector<8x8xi32>
    %c1_i32_13 = arith.constant 1 : i32
    %25 = vector.broadcast %c1_i32_13 : i32 to vector<8x8xi32>
    %26 = arith.addi %21, %25 : vector<8x8xi32>
    %c1_i32_14 = arith.constant 1 : i32
    %27 = vector.broadcast %c1_i32_14 : i32 to vector<8x8xi32>
    %28 = arith.muli %26, %27 : vector<8x8xi32>
    %29 = arith.cmpi slt, %20, %28 : vector<8x8xi32>
    %30 = arith.andi %24, %29 : vector<8x8xi1>
    %31 = arith.extui %30 : vector<8x8xi1> to vector<8x8xi32>
    %32 = arith.sitofp %31 : vector<8x8xi32> to vector<8x8xf32>
    %cst_15 = arith.constant dense<0.000000e+00> : vector<8x32xf32>
    %33 = tpu.matmul %32, %3, %cst_15 {dimension_numbers = #tpu.dot_dimension_numbers<[1], [0], [0], [1], [0, 0, 1, 1], [], []>} : vector<8x8xf32>, vector<8x32xf32>, vector<8x32xf32> -> vector<8x32xf32>
    %cst_16 = arith.constant 1.000000e+00 : f32
    %34 = vector.broadcast %cst_16 : f32 to vector<8x32xf32>
    %35 = arith.mulf %33, %34 : vector<8x32xf32>
    %c0_17 = arith.constant 0 : index
    %c0_18 = arith.constant 0 : index
    %36 = vector.load %arg11[%c0_17, %c0_18] : memref<1x32xf32, #tpu.memory_space<vmem>>, vector<1x32xf32>
    %cst_19 = arith.constant dense<0.000000e+00> : vector<32xf32>
    %37 = vector.multi_reduction <add>, %36, %cst_19 [0] : vector<1x32xf32> to vector<32xf32>
    %38 = vector.shape_cast %37 : vector<32xf32> to vector<1x32xf32>
    %cst_20 = arith.constant 1.000000e+00 : f32
    %39 = vector.broadcast %cst_20 : f32 to vector<1x32xf32>
    %40 = arith.divf %38, %39 : vector<1x32xf32>
    %41 = vector.broadcast %40 : vector<1x32xf32> to vector<8x32xf32>
    %42 = arith.addf %35, %41 : vector<8x32xf32>
    %c0_21 = arith.constant 0 : index
    %c0_22 = arith.constant 0 : index
    %43 = vector.load %arg7[%c0_21, %c0_22] : memref<32x32xbf16, #tpu.memory_space<vmem>>, vector<32x32xbf16>
    %44 = arith.truncf %42 : vector<8x32xf32> to vector<8x32xbf16>
    %cst_23 = arith.constant dense<0.000000e+00> : vector<8x32xf32>
    %45 = tpu.matmul %44, %43, %cst_23 {dimension_numbers = #tpu.dot_dimension_numbers<[1], [0], [0], [1], [0, 0, 1, 1], [], []>} : vector<8x32xbf16>, vector<32x32xbf16>, vector<8x32xf32> -> vector<8x32xf32>
    %c0_24 = arith.constant 0 : index
    %c0_25 = arith.constant 0 : index
    %46 = vector.load %arg8[%c0_24, %c0_25] : memref<1x32xf32, #tpu.memory_space<vmem>>, vector<1x32xf32>
    %47 = vector.broadcast %46 : vector<1x32xf32> to vector<8x32xf32>
    %48 = arith.addf %45, %47 : vector<8x32xf32>
    %49 = arith.negf %48 : vector<8x32xf32>
    %50 = math.exp %49 : vector<8x32xf32>
    %cst_26 = arith.constant 1.000000e+00 : f32
    %51 = vector.broadcast %cst_26 : f32 to vector<8x32xf32>
    %52 = arith.addf %51, %50 : vector<8x32xf32>
    %53 = arith.divf %51, %52 : vector<8x32xf32>
    %c0_27 = arith.constant 0 : index
    %c0_28 = arith.constant 0 : index
    %54 = vector.load %arg9[%c0_27, %c0_28] : memref<32x32xbf16, #tpu.memory_space<vmem>>, vector<32x32xbf16>
    %55 = arith.truncf %53 : vector<8x32xf32> to vector<8x32xbf16>
    %cst_29 = arith.constant dense<0.000000e+00> : vector<8x32xf32>
    %56 = tpu.matmul %55, %54, %cst_29 {dimension_numbers = #tpu.dot_dimension_numbers<[1], [0], [0], [1], [0, 0, 1, 1], [], []>} : vector<8x32xbf16>, vector<32x32xbf16>, vector<8x32xf32> -> vector<8x32xf32>
    %c0_30 = arith.constant 0 : index
    %c0_31 = arith.constant 0 : index
    %57 = vector.load %arg10[%c0_30, %c0_31] : memref<1x32xf32, #tpu.memory_space<vmem>>, vector<1x32xf32>
    %58 = vector.broadcast %57 : vector<1x32xf32> to vector<8x32xf32>
    %59 = arith.addf %56, %58 : vector<8x32xf32>
    %c0_32 = arith.constant 0 : index
    %c0_33 = arith.constant 0 : index
    %c0_34 = arith.constant 0 : index
    %60 = vector.load %arg4[%c0_32, %c0_33, %c0_34] : memref<1x8x1xi32, #tpu.memory_space<vmem>>, vector<1x8x1xi32>
    %61 = vector.shape_cast %60 : vector<1x8x1xi32> to vector<8x1xi32>
    %62 = tpu.iota {dimensions = array<i32: 1>} : vector<8x8xi32>
    %63 = vector.broadcast %61 : vector<8x1xi32> to vector<8x8xi32>
    %64 = arith.cmpi eq, %62, %63 : vector<8x8xi32>
    %65 = arith.extui %64 : vector<8x8xi1> to vector<8x8xi32>
    %66 = arith.sitofp %65 : vector<8x8xi32> to vector<8x8xf32>
    %cst_35 = arith.constant dense<0.000000e+00> : vector<8x32xf32>
    %67 = tpu.matmul %66, %3, %cst_35 {dimension_numbers = #tpu.dot_dimension_numbers<[1], [0], [0], [1], [0, 0, 1, 1], [], []>} : vector<8x8xf32>, vector<8x32xf32>, vector<8x32xf32> -> vector<8x32xf32>
    %c0_36 = arith.constant 0 : index
    %c0_37 = arith.constant 0 : index
    %68 = vector.load %arg12[%c0_36, %c0_37] : memref<32x32xbf16, #tpu.memory_space<vmem>>, vector<32x32xbf16>
    %69 = arith.truncf %1 : vector<8x32xf32> to vector<8x32xbf16>
    %cst_38 = arith.constant dense<0.000000e+00> : vector<8x32xf32>
    %70 = tpu.matmul %69, %68, %cst_38 {dimension_numbers = #tpu.dot_dimension_numbers<[1], [0], [0], [1], [0, 0, 1, 1], [], []>} : vector<8x32xbf16>, vector<32x32xbf16>, vector<8x32xf32> -> vector<8x32xf32>
    %c0_39 = arith.constant 0 : index
    %c0_40 = arith.constant 0 : index
    %71 = vector.load %arg13[%c0_39, %c0_40] : memref<1x32xf32, #tpu.memory_space<vmem>>, vector<1x32xf32>
    %72 = vector.broadcast %71 : vector<1x32xf32> to vector<8x32xf32>
    %73 = arith.addf %70, %72 : vector<8x32xf32>
    %c0_41 = arith.constant 0 : index
    %c0_42 = arith.constant 0 : index
    %74 = vector.load %arg14[%c0_41, %c0_42] : memref<32x32xbf16, #tpu.memory_space<vmem>>, vector<32x32xbf16>
    %75 = arith.truncf %3 : vector<8x32xf32> to vector<8x32xbf16>
    %cst_43 = arith.constant dense<0.000000e+00> : vector<8x32xf32>
    %76 = tpu.matmul %75, %74, %cst_43 {dimension_numbers = #tpu.dot_dimension_numbers<[1], [0], [0], [1], [0, 0, 1, 1], [], []>} : vector<8x32xbf16>, vector<32x32xbf16>, vector<8x32xf32> -> vector<8x32xf32>
    %c0_44 = arith.constant 0 : index
    %c0_45 = arith.constant 0 : index
    %77 = vector.load %arg15[%c0_44, %c0_45] : memref<1x32xf32, #tpu.memory_space<vmem>>, vector<1x32xf32>
    %78 = vector.broadcast %77 : vector<1x32xf32> to vector<8x32xf32>
    %79 = arith.addf %76, %78 : vector<8x32xf32>
    %c0_46 = arith.constant 0 : index
    %c0_47 = arith.constant 0 : index
    %80 = vector.load %arg16[%c0_46, %c0_47] : memref<32x32xbf16, #tpu.memory_space<vmem>>, vector<32x32xbf16>
    %81 = arith.truncf %5 : vector<8x32xf32> to vector<8x32xbf16>
    %cst_48 = arith.constant dense<0.000000e+00> : vector<8x32xf32>
    %82 = tpu.matmul %81, %80, %cst_48 {dimension_numbers = #tpu.dot_dimension_numbers<[1], [0], [0], [1], [0, 0, 1, 1], [], []>} : vector<8x32xbf16>, vector<32x32xbf16>, vector<8x32xf32> -> vector<8x32xf32>
    %c0_49 = arith.constant 0 : index
    %c0_50 = arith.constant 0 : index
    %83 = vector.load %arg17[%c0_49, %c0_50] : memref<1x32xf32, #tpu.memory_space<vmem>>, vector<1x32xf32>
    %84 = vector.broadcast %83 : vector<1x32xf32> to vector<8x32xf32>
    %85 = arith.addf %82, %84 : vector<8x32xf32>
    %86 = tpu.iota {dimensions = array<i32: 0>} : vector<8x8xi32>
    %87 = tpu.iota {dimensions = array<i32: 1>} : vector<8x8xi32>
    %c1_i32_51 = arith.constant 1 : i32
    %88 = vector.broadcast %c1_i32_51 : i32 to vector<8x8xi32>
    %89 = arith.muli %86, %88 : vector<8x8xi32>
    %90 = arith.cmpi eq, %87, %89 : vector<8x8xi32>
    %91 = arith.extui %90 : vector<8x8xi1> to vector<8x8xi32>
    %92 = arith.sitofp %91 : vector<8x8xi32> to vector<8x8xf32>
    %cst_52 = arith.constant dense<0.000000e+00> : vector<8x32xf32>
    %93 = tpu.matmul %92, %73, %cst_52 {dimension_numbers = #tpu.dot_dimension_numbers<[1], [0], [0], [1], [0, 0, 1, 1], [], []>} : vector<8x8xf32>, vector<8x32xf32>, vector<8x32xf32> -> vector<8x32xf32>
    %94 = arith.truncf %93 : vector<8x32xf32> to vector<8x32xbf16>
    %95 = arith.truncf %79 : vector<8x32xf32> to vector<8x32xbf16>
    %cst_53 = arith.constant dense<0.000000e+00> : vector<8x8xf32>
    %96 = tpu.matmul %94, %95, %cst_53 {dimension_numbers = #tpu.dot_dimension_numbers<[1], [1], [0], [0], [0, 0, 1, 0], [], []>} : vector<8x32xbf16>, vector<8x32xbf16>, vector<8x8xf32> -> vector<8x8xf32>
    %cst_54 = arith.constant 0.176776692 : f32
    %97 = vector.broadcast %cst_54 : f32 to vector<8x8xf32>
    %98 = arith.mulf %96, %97 : vector<8x8xf32>
    %c0_i32 = arith.constant 0 : i32
    %99 = vector.broadcast %c0_i32 : i32 to vector<8x8xi32>
    %100 = arith.subi %89, %99 : vector<8x8xi32>
    %c0_i32_55 = arith.constant 0 : i32
    %101 = vector.broadcast %c0_i32_55 : i32 to vector<8x8xi32>
    %102 = arith.maxsi %100, %101 : vector<8x8xi32>
    %c0_i32_56 = arith.constant 0 : i32
    %103 = vector.broadcast %c0_i32_56 : i32 to vector<8x8xi32>
    %104 = arith.addi %89, %103 : vector<8x8xi32>
    %c1_i32_57 = arith.constant 1 : i32
    %105 = vector.broadcast %c1_i32_57 : i32 to vector<8x8xi32>
    %106 = arith.addi %104, %105 : vector<8x8xi32>
    %c8_i32 = arith.constant 8 : i32
    %107 = vector.broadcast %c8_i32 : i32 to vector<8x8xi32>
    %108 = arith.minsi %106, %107 : vector<8x8xi32>
    %109 = arith.cmpi sge, %87, %102 : vector<8x8xi32>
    %110 = arith.cmpi slt, %87, %108 : vector<8x8xi32>
    %111 = arith.andi %109, %110 : vector<8x8xi1>
    %cst_58 = arith.constant -1.000000e+30 : f32
    %112 = vector.broadcast %cst_58 : f32 to vector<8x8xf32>
    %113 = arith.select %111, %98, %112 : vector<8x8xi1>, vector<8x8xf32>
    %cst_59 = arith.constant dense<0xFF800000> : vector<8xf32>
    %114 = vector.multi_reduction <maximumf>, %113, %cst_59 [1] : vector<8x8xf32> to vector<8xf32>
    %115 = vector.shape_cast %114 : vector<8xf32> to vector<8x1xf32>
    %116 = vector.broadcast %115 : vector<8x1xf32> to vector<8x8xf32>
    %117 = arith.subf %113, %116 : vector<8x8xf32>
    %118 = math.exp %117 : vector<8x8xf32>
    %cst_60 = arith.constant dense<0.000000e+00> : vector<8xf32>
    %119 = vector.multi_reduction <add>, %118, %cst_60 [1] : vector<8x8xf32> to vector<8xf32>
    %120 = vector.shape_cast %119 : vector<8xf32> to vector<8x1xf32>
    %121 = tpu.reciprocal %120 {approx = true} : vector<8x1xf32> -> vector<8x1xf32>
    %122 = vector.broadcast %121 : vector<8x1xf32> to vector<8x8xf32>
    %123 = arith.mulf %118, %122 : vector<8x8xf32>
    %124 = arith.truncf %123 : vector<8x8xf32> to vector<8x8xbf16>
    %125 = arith.truncf %85 : vector<8x32xf32> to vector<8x32xbf16>
    %cst_61 = arith.constant dense<0.000000e+00> : vector<8x32xf32>
    %126 = tpu.matmul %124, %125, %cst_61 {dimension_numbers = #tpu.dot_dimension_numbers<[1], [0], [0], [1], [0, 0, 1, 1], [], []>} : vector<8x8xbf16>, vector<8x32xbf16>, vector<8x32xf32> -> vector<8x32xf32>
    %127 = vector.broadcast %17 : vector<8x1xf32> to vector<8x32xf32>
    %128 = arith.mulf %127, %59 : vector<8x32xf32>
    %129 = vector.broadcast %18 : vector<8x1xf32> to vector<8x32xf32>
    %130 = arith.mulf %129, %67 : vector<8x32xf32>
    %131 = arith.addf %128, %130 : vector<8x32xf32>
    %132 = vector.broadcast %19 : vector<8x1xf32> to vector<8x32xf32>
    %133 = arith.mulf %132, %126 : vector<8x32xf32>
    %134 = arith.addf %131, %133 : vector<8x32xf32>
    %c0_62 = arith.constant 0 : index
    %c0_63 = arith.constant 0 : index
    %c0_64 = arith.constant 0 : index
    %135 = vector.load %arg18[%c0_62, %c0_63, %c0_64] : memref<1x8x32xf32, #tpu.memory_space<vmem>>, vector<1x8x32xf32>
    %136 = vector.shape_cast %135 : vector<1x8x32xf32> to vector<8x32xf32>
    %137 = vector.shape_cast %134 : vector<8x32xf32> to vector<1x8x32xf32>
    tpu.vector_store %arg18[%c0_62, %c0_63, %c0_64], %137 {strides = array<i32>} : memref<1x8x32xf32, #tpu.memory_space<vmem>>, vector<1x8x32xf32>,
    return
  }
  func.func @transform_0(%arg0: i32) -> (i32, i32, i32) {
    %c0_i32 = arith.constant 0 : i32
    %c0_i32_0 = arith.constant 0 : i32
    %c0_i32_1 = arith.constant 0 : i32
    return %arg0, %c0_i32, %c0_i32_0 : i32, i32, i32
  }
  func.func @transform_1(%arg0: i32) -> (i32, i32, i32) {
    %c0_i32 = arith.constant 0 : i32
    %c0_i32_0 = arith.constant 0 : i32
    %c0_i32_1 = arith.constant 0 : i32
    return %arg0, %c0_i32, %c0_i32_0 : i32, i32, i32
  }
  func.func @transform_2(%arg0: i32) -> (i32, i32, i32) {
    %c0_i32 = arith.constant 0 : i32
    %c0_i32_0 = arith.constant 0 : i32
    %c0_i32_1 = arith.constant 0 : i32
    return %arg0, %c0_i32, %c0_i32_0 : i32, i32, i32
  }
  func.func @transform_3(%arg0: i32) -> (i32, i32, i32) {
    %c0_i32 = arith.constant 0 : i32
    %c0_i32_0 = arith.constant 0 : i32
    %c0_i32_1 = arith.constant 0 : i32
    return %arg0, %c0_i32, %c0_i32_0 : i32, i32, i32
  }
  func.func @transform_4(%arg0: i32) -> (i32, i32) {
    %c0_i32 = arith.constant 0 : i32
    %c0_i32_0 = arith.constant 0 : i32
    %c0_i32_1 = arith.constant 0 : i32
    return %c0_i32, %c0_i32_0 : i32, i32
  }
  func.func @transform_5(%arg0: i32) -> (i32, i32) {
    %c0_i32 = arith.constant 0 : i32
    %c0_i32_0 = arith.constant 0 : i32
    %c0_i32_1 = arith.constant 0 : i32
    return %c0_i32, %c0_i32_0 : i32, i32
  }
  func.func @transform_6(%arg0: i32) -> (i32, i32) {
    %c0_i32 = arith.constant 0 : i32
    %c0_i32_0 = arith.constant 0 : i32
    %c0_i32_1 = arith.constant 0 : i32
    return %c0_i32, %c0_i32_0 : i32, i32
  }
  func.func @transform_7(%arg0: i32) -> (i32, i32) {
    %c0_i32 = arith.constant 0 : i32
    %c0_i32_0 = arith.constant 0 : i32
    %c0_i32_1 = arith.constant 0 : i32
    return %c0_i32, %c0_i32_0 : i32, i32
  }
  func.func @transform_8(%arg0: i32) -> (i32, i32) {
    %c0_i32 = arith.constant 0 : i32
    %c0_i32_0 = arith.constant 0 : i32
    %c0_i32_1 = arith.constant 0 : i32
    return %c0_i32, %c0_i32_0 : i32, i32
  }
  func.func @transform_9(%arg0: i32) -> (i32, i32) {
    %c0_i32 = arith.constant 0 : i32
    %c0_i32_0 = arith.constant 0 : i32
    %c0_i32_1 = arith.constant 0 : i32
    return %c0_i32, %c0_i32_0 : i32, i32
  }
  func.func @transform_10(%arg0: i32) -> (i32, i32) {
    %c0_i32 = arith.constant 0 : i32
    %c0_i32_0 = arith.constant 0 : i32
    %c0_i32_1 = arith.constant 0 : i32
    return %c0_i32, %c0_i32_0 : i32, i32
  }
  func.func @transform_11(%arg0: i32) -> (i32, i32) {
    %c0_i32 = arith.constant 0 : i32
    %c0_i32_0 = arith.constant 0 : i32
    %c0_i32_1 = arith.constant 0 : i32
    return %c0_i32, %c0_i32_0 : i32, i32
  }
  func.func @transform_12(%arg0: i32) -> (i32, i32) {
    %c0_i32 = arith.constant 0 : i32
    %c0_i32_0 = arith.constant 0 : i32
    %c0_i32_1 = arith.constant 0 : i32
    return %c0_i32, %c0_i32_0 : i32, i32
  }
  func.func @transform_13(%arg0: i32) -> (i32, i32) {
    %c0_i32 = arith.constant 0 : i32
    %c0_i32_0 = arith.constant 0 : i32
    %c0_i32_1 = arith.constant 0 : i32
    return %c0_i32, %c0_i32_0 : i32, i32
  }
  func.func @transform_14(%arg0: i32) -> (i32, i32) {
    %c0_i32 = arith.constant 0 : i32
    %c0_i32_0 = arith.constant 0 : i32
    %c0_i32_1 = arith.constant 0 : i32
    return %c0_i32, %c0_i32_0 : i32, i32
  }
  func.func @transform_15(%arg0: i32) -> (i32, i32) {
    %c0_i32 = arith.constant 0 : i32
    %c0_i32_0 = arith.constant 0 : i32
    %c0_i32_1 = arith.constant 0 : i32
    return %c0_i32, %c0_i32_0 : i32, i32
  }
  func.func @transform_16(%arg0: i32) -> (i32, i32) {
    %c0_i32 = arith.constant 0 : i32
    %c0_i32_0 = arith.constant 0 : i32
    %c0_i32_1 = arith.constant 0 : i32
    return %c0_i32, %c0_i32_0 : i32, i32
  }
  func.func @transform_17(%arg0: i32) -> (i32, i32, i32) {
    %c0_i32 = arith.constant 0 : i32
    %c0_i32_0 = arith.constant 0 : i32
    %c0_i32_1 = arith.constant 0 : i32
    return %arg0, %c0_i32, %c0_i32_0 : i32, i32, i32
  }
}

</mosaic_0001>

<llo_original>
// kernel: tpu_custom_call.1
$region0: #{tpu_custom_call.1}
  #allocation0 [shape = 'u32[]', space=smem, size = 0x4, offset = 0x4, fixed_abs, tag = 'smem constant byte address 0x4 - core index']
  #allocation1 [shape = 'u32[144,128]{1,0:T(1,128)}', space=vmem, size = 0x12000, scoped, tag = 'internal scratch']
  %s0 = inlined_call_operand.vmem [shape: f32[2,8,32], index: 0, kind: input, shape index: {}]
  %s1 = inlined_call_operand.vmem [shape: f32[2,8,32], index: 1, kind: input, shape index: {}]
  %s2 = inlined_call_operand.hbm [shape: f32[2,8,32], index: 2, kind: input, shape index: {}]
  %s3 = inlined_call_operand.vmem [shape: s32[2,8,1], index: 3, kind: input, shape index: {}]
  %s4 = inlined_call_operand.vmem [shape: bf16[32,3], index: 4, kind: input, shape index: {}]
  %s5 = inlined_call_operand.hbm [shape: f32[1,3], index: 5, kind: input, shape index: {}]
  %s6 = inlined_call_operand.hbm [shape: bf16[32,32], index: 6, kind: input, shape index: {}]
  %s7 = inlined_call_operand.hbm [shape: f32[1,32], index: 7, kind: input, shape index: {}]
  %s8 = inlined_call_operand.vmem [shape: bf16[32,32], index: 8, kind: input, shape index: {}]
  %s9 = inlined_call_operand.vmem [shape: f32[1,32], index: 9, kind: input, shape index: {}]
  %s10 = inlined_call_operand.vmem [shape: f32[1,32], index: 10, kind: input, shape index: {}]
  %s11 = inlined_call_operand.hbm [shape: bf16[32,32], index: 11, kind: input, shape index: {}]
  %s12 = inlined_call_operand.vmem [shape: f32[1,32], index: 12, kind: input, shape index: {}]
  %s13 = inlined_call_operand.hbm [shape: bf16[32,32], index: 13, kind: input, shape index: {}]
  %s14 = inlined_call_operand.vmem [shape: f32[1,32], index: 14, kind: input, shape index: {}]
  %s15 = inlined_call_operand.hbm [shape: bf16[32,32], index: 15, kind: input, shape index: {}]
  %s16 = inlined_call_operand.vmem [shape: f32[1,32], index: 16, kind: input, shape index: {}]
  %s17 = inlined_call_operand.hbm [shape: f32[2,8,32], index: 17, kind: output, shape index: {}]
  %s18 = sld [smem:[#allocation0]]
  $region129: #{tpu_custom_call.1} parent=0
    _
  %s20 = ssub.s32 1, %s18
  %s21 = scalar_select 0, %s20, %s18
  $region1: #{tpu_custom_call.1} parent=0
    #allocation2 [shape = 'u8[8192]{0}', space=vmem, size = 0x2000, scoped, tag = 'input window, operand 2']
    #allocation3 [shape = 's32[2]{0}', space=sflag, size = 0x8, scoped, tag = 'scoped memory for tpu_custom_call.1']
    #allocation4 [shape = 's32[2]{0}', space=sflag, size = 0x8, scoped, tag = 'scoped memory for tpu_custom_call.1']
    #allocation5 [shape = 'u8[512]{0}', space=vmem, size = 0x400, scoped, tag = 'input window, operand 5, single buffered']
    #allocation6 [shape = 's32[1]{0}', space=sflag, size = 0x4, scoped, tag = 'scoped memory for tpu_custom_call.1']
    #allocation7 [shape = 'u8[8192]{0}', space=vmem, size = 0x2000, scoped, tag = 'input window, operand 6, single buffered']
    #allocation8 [shape = 'u8[512]{0}', space=vmem, size = 0x400, scoped, tag = 'input window, operand 7, single buffered']
    #allocation9 [shape = 's32[1]{0}', space=sflag, size = 0x4, scoped, tag = 'scoped memory for tpu_custom_call.1']
    #allocation10 [shape = 'u8[8192]{0}', space=vmem, size = 0x2000, scoped, tag = 'input window, operand 11, single buffered']
    #allocation11 [shape = 'u8[8192]{0}', space=vmem, size = 0x2000, scoped, tag = 'input window, operand 13, single buffered']
    #allocation12 [shape = 's32[1]{0}', space=sflag, size = 0x4, scoped, tag = 'scoped memory for tpu_custom_call.1']
    #allocation13 [shape = 'u8[8192]{0}', space=vmem, size = 0x2000, scoped, tag = 'input window, operand 15, single buffered']
    #allocation14 [shape = 'u8[8192]{0}', space=vmem, size = 0x2000, scoped, tag = 'output window, operand 0']
    %22 = vsyncpa [#allocation3], 0
    %s23 = scalar_lea.sflag [#allocation3], 1
    %24 = vsyncpa %s23, 0
    %25 = vsyncpa [#allocation6], 0
    %26 = vsyncpa [#allocation9], 0
    %27 = vsyncpa [#allocation12], 0
    %28 = vsyncpa [#allocation4], 0
    %s29 = scalar_lea.sflag [#allocation4], 1
    %30 = vsyncpa %s29, 0
    loop: start=0, step=1, limit=4
    $region2: #{tpu_custom_call.1} parent=1 // loop_pre_header
      _
    $region3: #{tpu_custom_call.1} parent=1 // loop_header
      %s32 = sphi 0, %s36
      %p33 = scmp.ge.s32.totalorder %s32, 4
      %s42 = sphi 0, %s44
      %s45 = sphi 0, %s42
      %s46 = sphi 0, %s45
      %s62 = sphi 0, %s46
      %s68 = sphi 0, %s70
      %s71 = sphi 0, %s68
      %s72 = sphi 0, %s71
      %s88 = sphi 0, %s72
      %s94 = sphi 0, %s96
      %s97 = sphi 0, %s94
      %s98 = sphi 0, %s97
      %s114 = sphi 0, %s98
      %s120 = sphi 0, %s122
      %s123 = sphi 0, %s120
      %s124 = sphi 0, %s123
      %s140 = sphi 0, %s124
      %s144 = sphi 0, %s144
      %s146 = sphi 0, %s144
      %s147 = sphi 0, %s146
      %s161 = sphi 0, %s147
      %s165 = sphi 0, %s165
      %s167 = sphi 0, %s165
      %s168 = sphi 0, %s167
      %s182 = sphi 0, %s168
      %s186 = sphi 0, %s186
      %s188 = sphi 0, %s186
      %s189 = sphi 0, %s188
      %s203 = sphi 0, %s189
      %s207 = sphi 0, %s207
      %s209 = sphi 0, %s207
      %s210 = sphi 0, %s209
      %s224 = sphi 0, %s210
      %s228 = sphi 0, %s228
      %s230 = sphi 0, %s228
      %s231 = sphi 0, %s230
      %s245 = sphi 0, %s231
      %s249 = sphi 0, %s249
      %s251 = sphi 0, %s249
      %s252 = sphi 0, %s251
      %s266 = sphi 0, %s252
      %s270 = sphi 0, %s270
      %s272 = sphi 0, %s270
      %s273 = sphi 0, %s272
      %s287 = sphi 0, %s273
      %s291 = sphi 0, %s291
      %s293 = sphi 0, %s291
      %s294 = sphi 0, %s293
      %s308 = sphi 0, %s294
      %s312 = sphi 0, %s312
      %s314 = sphi 0, %s312
      %s315 = sphi 0, %s314
      %s329 = sphi 0, %s315
      %s333 = sphi 0, %s333
      %s335 = sphi 0, %s333
      %s336 = sphi 0, %s335
      %s350 = sphi 0, %s336
      %s354 = sphi 0, %s354
      %s356 = sphi 0, %s354
      %s357 = sphi 0, %s356
      %s371 = sphi 0, %s357
      %s375 = sphi 0, %s375
      %s377 = sphi 0, %s375
      %s378 = sphi 0, %s377
      %s392 = sphi 0, %s378
      %s396 = sphi 0, %s396
      %s398 = sphi 0, %s396
      %s399 = sphi 0, %s398
      %s413 = sphi 0, %s399
      %s419 = sphi 0, %s421
      %s422 = sphi 0, %s419
      %s423 = sphi 0, %s422
      %s439 = sphi 0, %s423
    $region4: #{tpu_custom_call.1} parent=1 // loop_header_branch
      %35 = sbr.rel (%p33) target = $region8
    $region5: #{tpu_custom_call.1} parent=1 // loop_body
      %s37 = ssub.s32 %s32, 1
      %s38 = ssub.s32 %s32, 2
      %s39 = sadd.s32 %s32, 1
      %s40 = ssub.s32 %s32, %s39
      %p41 = scmp.eq.s32.totalorder %s40, 0
      %s43 = sadd.s32 %s42, 1
      %s44 = scalar_select %p41, %s42, %s43
      %p47 = pneg %p41
      %p48 = scmp.eq.s32.totalorder %s32, 1
      %p49 = por %p47, %p48
      %p50 = scmp.ne.s32.totalorder %s42, %s45
      %p51 = scmp.eq.s32.totalorder %s32, 0
      %p52 = por %p50, %p51
      %p53 = scmp.ne.s32.totalorder %s42, %s45
      %p54 = scmp.eq.s32.totalorder %s37, 1
      %p55 = por %p53, %p54
      %p56 = scmp.ne.s32.totalorder %s45, %s46
      %p57 = scmp.eq.s32.totalorder %s37, 0
      %p58 = por %p56, %p57
      %p59 = scmp.ne.s32.totalorder %s45, %s46
      %p60 = scmp.eq.s32.totalorder %s38, 1
      %p61 = por %p59, %p60
      %p63 = scmp.ne.s32.totalorder %s46, %s62
      %p64 = scmp.eq.s32.totalorder %s38, 0
      %p65 = por %p63, %p64
      %s66 = ssub.s32 %s32, %s39
      %p67 = scmp.eq.s32.totalorder %s66, 0
      %s69 = sadd.s32 %s68, 1
      %s70 = scalar_select %p67, %s68, %s69
      %p73 = pneg %p67
      %p74 = scmp.eq.s32.totalorder %s32, 1
      %p75 = por %p73, %p74
      %p76 = scmp.ne.s32.totalorder %s68, %s71
      %p77 = scmp.eq.s32.totalorder %s32, 0
      %p78 = por %p76, %p77
      %p79 = scmp.ne.s32.totalorder %s68, %s71
      %p80 = scmp.eq.s32.totalorder %s37, 1
      %p81 = por %p79, %p80
      %p82 = scmp.ne.s32.totalorder %s71, %s72
      %p83 = scmp.eq.s32.totalorder %s37, 0
      %p84 = por %p82, %p83
      %p85 = scmp.ne.s32.totalorder %s71, %s72
      %p86 = scmp.eq.s32.totalorder %s38, 1
      %p87 = por %p85, %p86
      %p89 = scmp.ne.s32.totalorder %s72, %s88
      %p90 = scmp.eq.s32.totalorder %s38, 0
      %p91 = por %p89, %p90
      %s92 = ssub.s32 %s32, %s39
      %p93 = scmp.eq.s32.totalorder %s92, 0
      %s95 = sadd.s32 %s94, 1
      %s96 = scalar_select %p93, %s94, %s95
      %p99 = pneg %p93
      %p100 = scmp.eq.s32.totalorder %s32, 1
      %p101 = por %p99, %p100
      %p102 = scmp.ne.s32.totalorder %s94, %s97
      %p103 = scmp.eq.s32.totalorder %s32, 0
      %p104 = por %p102, %p103
      %p105 = scmp.ne.s32.totalorder %s94, %s97
      %p106 = scmp.eq.s32.totalorder %s37, 1
      %p107 = por %p105, %p106
      %p108 = scmp.ne.s32.totalorder %s97, %s98
      %p109 = scmp.eq.s32.totalorder %s37, 0
      %p110 = por %p108, %p109
      %p111 = scmp.ne.s32.totalorder %s97, %s98
      %p112 = scmp.eq.s32.totalorder %s38, 1
      %p113 = por %p111, %p112
      %p115 = scmp.ne.s32.totalorder %s98, %s114
      %p116 = scmp.eq.s32.totalorder %s38, 0
      %p117 = por %p115, %p116
      %s118 = ssub.s32 %s32, %s39
      %p119 = scmp.eq.s32.totalorder %s118, 0
      %s121 = sadd.s32 %s120, 1
      %s122 = scalar_select %p119, %s120, %s121
      %p125 = pneg %p119
      %p126 = scmp.eq.s32.totalorder %s32, 1
      %p127 = por %p125, %p126
      %p128 = scmp.ne.s32.totalorder %s120, %s123
      %p129 = scmp.eq.s32.totalorder %s32, 0
      %p130 = por %p128, %p129
      %p131 = scmp.ne.s32.totalorder %s120, %s123
      %p132 = scmp.eq.s32.totalorder %s37, 1
      %p133 = por %p131, %p132
      %p134 = scmp.ne.s32.totalorder %s123, %s124
      %p135 = scmp.eq.s32.totalorder %s37, 0
      %p136 = por %p134, %p135
      %p137 = scmp.ne.s32.totalorder %s123, %s124
      %p138 = scmp.eq.s32.totalorder %s38, 1
      %p139 = por %p137, %p138
      %p141 = scmp.ne.s32.totalorder %s124, %s140
      %p142 = scmp.eq.s32.totalorder %s38, 0
      %p143 = por %p141, %p142
      %s145 = sadd.s32 %s144, 1
      %p148 = scmp.eq.s32.totalorder %s32, 1
      %p149 = scmp.ne.s32.totalorder %s144, %s146
      %p150 = scmp.eq.s32.totalorder %s32, 0
      %p151 = por %p149, %p150
      %p152 = scmp.ne.s32.totalorder %s144, %s146
      %p153 = scmp.eq.s32.totalorder %s37, 1
      %p154 = por %p152, %p153
      %p155 = scmp.ne.s32.totalorder %s146, %s147
      %p156 = scmp.eq.s32.totalorder %s37, 0
      %p157 = por %p155, %p156
      %p158 = scmp.ne.s32.totalorder %s146, %s147
      %p159 = scmp.eq.s32.totalorder %s38, 1
      %p160 = por %p158, %p159
      %p162 = scmp.ne.s32.totalorder %s147, %s161
      %p163 = scmp.eq.s32.totalorder %s38, 0
      %p164 = por %p162, %p163
      %s166 = sadd.s32 %s165, 1
      %p169 = scmp.eq.s32.totalorder %s32, 1
      %p170 = scmp.ne.s32.totalorder %s165, %s167
      %p171 = scmp.eq.s32.totalorder %s32, 0
      %p172 = por %p170, %p171
      %p173 = scmp.ne.s32.totalorder %s165, %s167
      %p174 = scmp.eq.s32.totalorder %s37, 1
      %p175 = por %p173, %p174
      %p176 = scmp.ne.s32.totalorder %s167, %s168
      %p177 = scmp.eq.s32.totalorder %s37, 0
      %p178 = por %p176, %p177
      %p179 = scmp.ne.s32.totalorder %s167, %s168
      %p180 = scmp.eq.s32.totalorder %s38, 1
      %p181 = por %p179, %p180
      %p183 = scmp.ne.s32.totalorder %s168, %s182
      %p184 = scmp.eq.s32.totalorder %s38, 0
      %p185 = por %p183, %p184
      %s187 = sadd.s32 %s186, 1
      %p190 = scmp.eq.s32.totalorder %s32, 1
      %p191 = scmp.ne.s32.totalorder %s186, %s188
      %p192 = scmp.eq.s32.totalorder %s32, 0
      %p193 = por %p191, %p192
      %p194 = scmp.ne.s32.totalorder %s186, %s188
      %p195 = scmp.eq.s32.totalorder %s37, 1
      %p196 = por %p194, %p195
      %p197 = scmp.ne.s32.totalorder %s188, %s189
      %p198 = scmp.eq.s32.totalorder %s37, 0
      %p199 = por %p197, %p198
      %p200 = scmp.ne.s32.totalorder %s188, %s189
      %p201 = scmp.eq.s32.totalorder %s38, 1
      %p202 = por %p200, %p201
      %p204 = scmp.ne.s32.totalorder %s189, %s203
      %p205 = scmp.eq.s32.totalorder %s38, 0
      %p206 = por %p204, %p205
      %s208 = sadd.s32 %s207, 1
      %p211 = scmp.eq.s32.totalorder %s32, 1
      %p212 = scmp.ne.s32.totalorder %s207, %s209
      %p213 = scmp.eq.s32.totalorder %s32, 0
      %p214 = por %p212, %p213
      %p215 = scmp.ne.s32.totalorder %s207, %s209
      %p216 = scmp.eq.s32.totalorder %s37, 1
      %p217 = por %p215, %p216
      %p218 = scmp.ne.s32.totalorder %s209, %s210
      %p219 = scmp.eq.s32.totalorder %s37, 0
      %p220 = por %p218, %p219
      %p221 = scmp.ne.s32.totalorder %s209, %s210
      %p222 = scmp.eq.s32.totalorder %s38, 1
      %p223 = por %p221, %p222
      %p225 = scmp.ne.s32.totalorder %s210, %s224
      %p226 = scmp.eq.s32.totalorder %s38, 0
      %p227 = por %p225, %p226
      %s229 = sadd.s32 %s228, 1
      %p232 = scmp.eq.s32.totalorder %s32, 1
      %p233 = scmp.ne.s32.totalorder %s228, %s230
      %p234 = scmp.eq.s32.totalorder %s32, 0
      %p235 = por %p233, %p234
      %p236 = scmp.ne.s32.totalorder %s228, %s230
      %p237 = scmp.eq.s32.totalorder %s37, 1
      %p238 = por %p236, %p237
      %p239 = scmp.ne.s32.totalorder %s230, %s231
      %p240 = scmp.eq.s32.totalorder %s37, 0
      %p241 = por %p239, %p240
      %p242 = scmp.ne.s32.totalorder %s230, %s231
      %p243 = scmp.eq.s32.totalorder %s38, 1
      %p244 = por %p242, %p243
      %p246 = scmp.ne.s32.totalorder %s231, %s245
      %p247 = scmp.eq.s32.totalorder %s38, 0
      %p248 = por %p246, %p247
      %s250 = sadd.s32 %s249, 1
      %p253 = scmp.eq.s32.totalorder %s32, 1
      %p254 = scmp.ne.s32.totalorder %s249, %s251
      %p255 = scmp.eq.s32.totalorder %s32, 0
      %p256 = por %p254, %p255
      %p257 = scmp.ne.s32.totalorder %s249, %s251
      %p258 = scmp.eq.s32.totalorder %s37, 1
      %p259 = por %p257, %p258
      %p260 = scmp.ne.s32.totalorder %s251, %s252
      %p261 = scmp.eq.s32.totalorder %s37, 0
      %p262 = por %p260, %p261
      %p263 = scmp.ne.s32.totalorder %s251, %s252
      %p264 = scmp.eq.s32.totalorder %s38, 1
      %p265 = por %p263, %p264
      %p267 = scmp.ne.s32.totalorder %s252, %s266
      %p268 = scmp.eq.s32.totalorder %s38, 0
      %p269 = por %p267, %p268
      %s271 = sadd.s32 %s270, 1
      %p274 = scmp.eq.s32.totalorder %s32, 1
      %p275 = scmp.ne.s32.totalorder %s270, %s272
      %p276 = scmp.eq.s32.totalorder %s32, 0
      %p277 = por %p275, %p276
      %p278 = scmp.ne.s32.totalorder %s270, %s272
      %p279 = scmp.eq.s32.totalorder %s37, 1
      %p280 = por %p278, %p279
      %p281 = scmp.ne.s32.totalorder %s272, %s273
      %p282 = scmp.eq.s32.totalorder %s37, 0
      %p283 = por %p281, %p282
      %p284 = scmp.ne.s32.totalorder %s272, %s273
      %p285 = scmp.eq.s32.totalorder %s38, 1
      %p286 = por %p284, %p285
      %p288 = scmp.ne.s32.totalorder %s273, %s287
      %p289 = scmp.eq.s32.totalorder %s38, 0
      %p290 = por %p288, %p289
      %s292 = sadd.s32 %s291, 1
      %p295 = scmp.eq.s32.totalorder %s32, 1
      %p296 = scmp.ne.s32.totalorder %s291, %s293
      %p297 = scmp.eq.s32.totalorder %s32, 0
      %p298 = por %p296, %p297
      %p299 = scmp.ne.s32.totalorder %s291, %s293
      %p300 = scmp.eq.s32.totalorder %s37, 1
      %p301 = por %p299, %p300
      %p302 = scmp.ne.s32.totalorder %s293, %s294
      %p303 = scmp.eq.s32.totalorder %s37, 0
      %p304 = por %p302, %p303
      %p305 = scmp.ne.s32.totalorder %s293, %s294
      %p306 = scmp.eq.s32.totalorder %s38, 1
      %p307 = por %p305, %p306
      %p309 = scmp.ne.s32.totalorder %s294, %s308
      %p310 = scmp.eq.s32.totalorder %s38, 0
      %p311 = por %p309, %p310
      %s313 = sadd.s32 %s312, 1
      %p316 = scmp.eq.s32.totalorder %s32, 1
      %p317 = scmp.ne.s32.totalorder %s312, %s314
      %p318 = scmp.eq.s32.totalorder %s32, 0
      %p319 = por %p317, %p318
      %p320 = scmp.ne.s32.totalorder %s312, %s314
      %p321 = scmp.eq.s32.totalorder %s37, 1
      %p322 = por %p320, %p321
      %p323 = scmp.ne.s32.totalorder %s314, %s315
      %p324 = scmp.eq.s32.totalorder %s37, 0
      %p325 = por %p323, %p324
      %p326 = scmp.ne.s32.totalorder %s314, %s315
      %p327 = scmp.eq.s32.totalorder %s38, 1
      %p328 = por %p326, %p327
      %p330 = scmp.ne.s32.totalorder %s315, %s329
      %p331 = scmp.eq.s32.totalorder %s38, 0
      %p332 = por %p330, %p331
      %s334 = sadd.s32 %s333, 1
      %p337 = scmp.eq.s32.totalorder %s32, 1
      %p338 = scmp.ne.s32.totalorder %s333, %s335
      %p339 = scmp.eq.s32.totalorder %s32, 0
      %p340 = por %p338, %p339
      %p341 = scmp.ne.s32.totalorder %s333, %s335
      %p342 = scmp.eq.s32.totalorder %s37, 1
      %p343 = por %p341, %p342
      %p344 = scmp.ne.s32.totalorder %s335, %s336
      %p345 = scmp.eq.s32.totalorder %s37, 0
      %p346 = por %p344, %p345
      %p347 = scmp.ne.s32.totalorder %s335, %s336
      %p348 = scmp.eq.s32.totalorder %s38, 1
      %p349 = por %p347, %p348
      %p351 = scmp.ne.s32.totalorder %s336, %s350
      %p352 = scmp.eq.s32.totalorder %s38, 0
      %p353 = por %p351, %p352
      %s355 = sadd.s32 %s354, 1
      %p358 = scmp.eq.s32.totalorder %s32, 1
      %p359 = scmp.ne.s32.totalorder %s354, %s356
      %p360 = scmp.eq.s32.totalorder %s32, 0
      %p361 = por %p359, %p360
      %p362 = scmp.ne.s32.totalorder %s354, %s356
      %p363 = scmp.eq.s32.totalorder %s37, 1
      %p364 = por %p362, %p363
      %p365 = scmp.ne.s32.totalorder %s356, %s357
      %p366 = scmp.eq.s32.totalorder %s37, 0
      %p367 = por %p365, %p366
      %p368 = scmp.ne.s32.totalorder %s356, %s357
      %p369 = scmp.eq.s32.totalorder %s38, 1
      %p370 = por %p368, %p369
      %p372 = scmp.ne.s32.totalorder %s357, %s371
      %p373 = scmp.eq.s32.totalorder %s38, 0
      %p374 = por %p372, %p373
      %s376 = sadd.s32 %s375, 1
      %p379 = scmp.eq.s32.totalorder %s32, 1
      %p380 = scmp.ne.s32.totalorder %s375, %s377
      %p381 = scmp.eq.s32.totalorder %s32, 0
      %p382 = por %p380, %p381
      %p383 = scmp.ne.s32.totalorder %s375, %s377
      %p384 = scmp.eq.s32.totalorder %s37, 1
      %p385 = por %p383, %p384
      %p386 = scmp.ne.s32.totalorder %s377, %s378
      %p387 = scmp.eq.s32.totalorder %s37, 0
      %p388 = por %p386, %p387
      %p389 = scmp.ne.s32.totalorder %s377, %s378
      %p390 = scmp.eq.s32.totalorder %s38, 1
      %p391 = por %p389, %p390
      %p393 = scmp.ne.s32.totalorder %s378, %s392
      %p394 = scmp.eq.s32.totalorder %s38, 0
      %p395 = por %p393, %p394
      %s397 = sadd.s32 %s396, 1
      %p400 = scmp.eq.s32.totalorder %s32, 1
      %p401 = scmp.ne.s32.totalorder %s396, %s398
      %p402 = scmp.eq.s32.totalorder %s32, 0
      %p403 = por %p401, %p402
      %p404 = scmp.ne.s32.totalorder %s396, %s398
      %p405 = scmp.eq.s32.totalorder %s37, 1
      %p406 = por %p404, %p405
      %p407 = scmp.ne.s32.totalorder %s398, %s399
      %p408 = scmp.eq.s32.totalorder %s37, 0
      %p409 = por %p407, %p408
      %p410 = scmp.ne.s32.totalorder %s398, %s399
      %p411 = scmp.eq.s32.totalorder %s38, 1
      %p412 = por %p410, %p411
      %p414 = scmp.ne.s32.totalorder %s399, %s413
      %p415 = scmp.eq.s32.totalorder %s38, 0
      %p416 = por %p414, %p415
      %s417 = ssub.s32 %s32, %s39
      %p418 = scmp.eq.s32.totalorder %s417, 0
      %s420 = sadd.s32 %s419, 1
      %s421 = scalar_select %p418, %s419, %s420
      %p424 = pneg %p418
      %p425 = scmp.eq.s32.totalorder %s32, 1
      %p426 = por %p424, %p425
      %p427 = scmp.ne.s32.totalorder %s419, %s422
      %p428 = scmp.eq.s32.totalorder %s32, 0
      %p429 = por %p427, %p428
      %p430 = scmp.ne.s32.totalorder %s419, %s422
      %p431 = scmp.eq.s32.totalorder %s37, 1
      %p432 = por %p430, %p431
      %p433 = scmp.ne.s32.totalorder %s422, %s423
      %p434 = scmp.eq.s32.totalorder %s37, 0
      %p435 = por %p433, %p434
      %p436 = scmp.ne.s32.totalorder %s422, %s423
      %p437 = scmp.eq.s32.totalorder %s38, 1
      %p438 = por %p436, %p437
      %p440 = scmp.ne.s32.totalorder %s423, %s439
      %p441 = scmp.eq.s32.totalorder %s38, 0
      %p442 = por %p440, %p441
      %p443 = scmp.le.s32.totalorder 1, %s32
      %p444 = scmp.lt.s32.totalorder %s32, 3
      %p445 = pnand %p443, %p444
      %p446 = pneg %p445
      // Predicated region
      $region9: #{tpu_custom_call.1} parent=5 // pred_check
        _
      $region10: #{tpu_custom_call.1} parent=5 // pred_check_branch
        %448 = sbr.rel (%p445) target = $region12
      $region11: #{tpu_custom_call.1} parent=5 // pred_region
        %s449 = ssub.s32 %s32, 1
        // Predicated region
        $region13: #{tpu_custom_call.1} parent=11 // pred_check
          %p450 = pneg %p157
        $region14: #{tpu_custom_call.1} parent=11 // pred_check_branch
          %452 = sbr.rel (%p450) target = $region16
        $region15: #{tpu_custom_call.1} parent=11 // pred_region
          _
        $region16: #{tpu_custom_call.1} parent=11 // pred_fallthru
          _
        // Predicated region
        $region17: #{tpu_custom_call.1} parent=11 // pred_check
          %p453 = pneg %p178
        $region18: #{tpu_custom_call.1} parent=11 // pred_check_branch
          %455 = sbr.rel (%p453) target = $region20
        $region19: #{tpu_custom_call.1} parent=11 // pred_region
          %s457 = ssub.s32 16, 16
          %458 = vsyncadd [#allocation6], %s457
          %s460 = sshll.u32 [#allocation5], 4
          %s461 = int_to_ptr.vmem [resolvable:$true] %s460
          %463 = dma.hbm_to_vmem [thread:$0]  %s5, 16, %s461, [#allocation6]
        $region20: #{tpu_custom_call.1} parent=11 // pred_fallthru
          _
        // Predicated region
        $region21: #{tpu_custom_call.1} parent=11 // pred_check
          %p464 = pneg %p199
        $region22: #{tpu_custom_call.1} parent=11 // pred_check_branch
          %466 = sbr.rel (%p464) target = $region24
        $region23: #{tpu_custom_call.1} parent=11 // pred_region
          %s468 = ssub.s32 256, 256
          %469 = vsyncadd [#allocation6], %s468
          %s470 = sshll.u32 [#allocation7], 4
          %s471 = int_to_ptr.vmem [resolvable:$true] %s470
          %476 = dma.hbm_to_vmem [thread:$0]  %s6, 256, %s471, [#allocation6], 64, 64, 4
        $region24: #{tpu_custom_call.1} parent=11 // pred_fallthru
          _
        // Predicated region
        $region25: #{tpu_custom_call.1} parent=11 // pred_check
          %p477 = pneg %p220
        $region26: #{tpu_custom_call.1} parent=11 // pred_check_branch
          %479 = sbr.rel (%p477) target = $region28
        $region27: #{tpu_custom_call.1} parent=11 // pred_region
          %s481 = ssub.s32 16, 16
          %482 = vsyncadd [#allocation9], %s481
          %s484 = sshll.u32 [#allocation8], 4
          %s485 = int_to_ptr.vmem [resolvable:$true] %s484
          %487 = dma.hbm_to_vmem [thread:$0]  %s7, 16, %s485, [#allocation9]
        $region28: #{tpu_custom_call.1} parent=11 // pred_fallthru
          _
        // Predicated region
        $region29: #{tpu_custom_call.1} parent=11 // pred_check
          %p488 = pneg %p241
        $region30: #{tpu_custom_call.1} parent=11 // pred_check_branch
          %490 = sbr.rel (%p488) target = $region32
        $region31: #{tpu_custom_call.1} parent=11 // pred_region
          _
        $region32: #{tpu_custom_call.1} parent=11 // pred_fallthru
          _
        // Predicated region
        $region33: #{tpu_custom_call.1} parent=11 // pred_check
          %p491 = pneg %p262
        $region34: #{tpu_custom_call.1} parent=11 // pred_check_branch
          %493 = sbr.rel (%p491) target = $region36
        $region35: #{tpu_custom_call.1} parent=11 // pred_region
          _
        $region36: #{tpu_custom_call.1} parent=11 // pred_fallthru
          _
        // Predicated region
        $region37: #{tpu_custom_call.1} parent=11 // pred_check
          %p494 = pneg %p283
        $region38: #{tpu_custom_call.1} parent=11 // pred_check_branch
          %496 = sbr.rel (%p494) target = $region40
        $region39: #{tpu_custom_call.1} parent=11 // pred_region
          _
        $region40: #{tpu_custom_call.1} parent=11 // pred_fallthru
          _
        // Predicated region
        $region41: #{tpu_custom_call.1} parent=11 // pred_check
          %p497 = pneg %p304
        $region42: #{tpu_custom_call.1} parent=11 // pred_check_branch
          %499 = sbr.rel (%p497) target = $region44
        $region43: #{tpu_custom_call.1} parent=11 // pred_region
          %s501 = ssub.s32 256, 256
          %502 = vsyncadd [#allocation9], %s501
          %s503 = sshll.u32 [#allocation10], 4
          %s504 = int_to_ptr.vmem [resolvable:$true] %s503
          %509 = dma.hbm_to_vmem [thread:$0]  %s11, 256, %s504, [#allocation9], 64, 64, 4
        $region44: #{tpu_custom_call.1} parent=11 // pred_fallthru
          _
        // Predicated region
        $region45: #{tpu_custom_call.1} parent=11 // pred_check
          %p510 = pneg %p325
        $region46: #{tpu_custom_call.1} parent=11 // pred_check_branch
          %512 = sbr.rel (%p510) target = $region48
        $region47: #{tpu_custom_call.1} parent=11 // pred_region
          _
        $region48: #{tpu_custom_call.1} parent=11 // pred_fallthru
          _
        // Predicated region
        $region49: #{tpu_custom_call.1} parent=11 // pred_check
          %p513 = pneg %p346
        $region50: #{tpu_custom_call.1} parent=11 // pred_check_branch
          %515 = sbr.rel (%p513) target = $region52
        $region51: #{tpu_custom_call.1} parent=11 // pred_region
          %s517 = ssub.s32 256, 256
          %518 = vsyncadd [#allocation12], %s517
          %s519 = sshll.u32 [#allocation11], 4
          %s520 = int_to_ptr.vmem [resolvable:$true] %s519
          %525 = dma.hbm_to_vmem [thread:$0]  %s13, 256, %s520, [#allocation12], 64, 64, 4
        $region52: #{tpu_custom_call.1} parent=11 // pred_fallthru
          _
        // Predicated region
        $region53: #{tpu_custom_call.1} parent=11 // pred_check
          %p526 = pneg %p367
        $region54: #{tpu_custom_call.1} parent=11 // pred_check_branch
          %528 = sbr.rel (%p526) target = $region56
        $region55: #{tpu_custom_call.1} parent=11 // pred_region
          _
        $region56: #{tpu_custom_call.1} parent=11 // pred_fallthru
          _
        // Predicated region
        $region57: #{tpu_custom_call.1} parent=11 // pred_check
          %p529 = pneg %p388
        $region58: #{tpu_custom_call.1} parent=11 // pred_check_branch
          %531 = sbr.rel (%p529) target = $region60
        $region59: #{tpu_custom_call.1} parent=11 // pred_region
          %s533 = ssub.s32 256, 256
          %534 = vsyncadd [#allocation12], %s533
          %s535 = sshll.u32 [#allocation13], 4
          %s536 = int_to_ptr.vmem [resolvable:$true] %s535
          %541 = dma.hbm_to_vmem [thread:$0]  %s15, 256, %s536, [#allocation12], 64, 64, 4
        $region60: #{tpu_custom_call.1} parent=11 // pred_fallthru
          _
        // Predicated region
        $region61: #{tpu_custom_call.1} parent=11 // pred_check
          %p542 = pneg %p409
        $region62: #{tpu_custom_call.1} parent=11 // pred_check_branch
          %544 = sbr.rel (%p542) target = $region64
        $region63: #{tpu_custom_call.1} parent=11 // pred_region
          _
        $region64: #{tpu_custom_call.1} parent=11 // pred_fallthru
          _
      $region12: #{tpu_custom_call.1} parent=5 // pred_fallthru
        _
      %p545 = scmp.lt.s32.totalorder %s32, 2
      // Predicated region
      $region65: #{tpu_custom_call.1} parent=5 // pred_check
        %p546 = pneg %p545
      $region66: #{tpu_custom_call.1} parent=5 // pred_check_branch
        %548 = sbr.rel (%p546) target = $region68
      $region67: #{tpu_custom_call.1} parent=5 // pred_region
        // Predicated region
        $region69: #{tpu_custom_call.1} parent=67 // pred_check
          %p549 = pneg %p52
        $region70: #{tpu_custom_call.1} parent=67 // pred_check_branch
          %551 = sbr.rel (%p549) target = $region72
        $region71: #{tpu_custom_call.1} parent=67 // pred_region
          %p552 = scmp.lt.s32.totalorder %s32, 1
          %s553 = scalar_select %p552, %s32, 1
          %s554 = smul.addr %s553, 8
          %s555 = scalar_lea.vmem %s0, %s554
        $region72: #{tpu_custom_call.1} parent=67 // pred_fallthru
          _
        // Predicated region
        $region73: #{tpu_custom_call.1} parent=67 // pred_check
          %p556 = pneg %p78
        $region74: #{tpu_custom_call.1} parent=67 // pred_check_branch
          %558 = sbr.rel (%p556) target = $region76
        $region75: #{tpu_custom_call.1} parent=67 // pred_region
          %p559 = scmp.lt.s32.totalorder %s32, 1
          %s560 = scalar_select %p559, %s32, 1
          %s561 = smul.addr %s560, 8
          %s562 = scalar_lea.vmem %s1, %s561
        $region76: #{tpu_custom_call.1} parent=67 // pred_fallthru
          _
        // Predicated region
        $region77: #{tpu_custom_call.1} parent=67 // pred_check
          %p563 = pneg %p104
        $region78: #{tpu_custom_call.1} parent=67 // pred_check_branch
          %565 = sbr.rel (%p563) target = $region80
        $region79: #{tpu_custom_call.1} parent=67 // pred_region
          %s566 = sand.u32 %s94, 1
          %s567 = scalar_lea.sflag [#allocation3], %s566
          %s568 = sand.u32 %s94, 1
          %s569 = smul.addr %s568, 8
          %s570 = scalar_lea.vmem [#allocation2], %s569
          %s572 = ssub.s32 128, 128
          %573 = vsyncadd %s567, %s572
          %s574 = smul.addr %s32, 128
          %s575 = scalar_lea.hbm %s2, %s574
          %s577 = sshll.u32 %s570, 4
          %s578 = int_to_ptr.vmem [resolvable:$true] %s577
          %580 = dma.hbm_to_vmem [thread:$0]  %s575, 128, %s578, %s567
        $region80: #{tpu_custom_call.1} parent=67 // pred_fallthru
          _
        // Predicated region
        $region81: #{tpu_custom_call.1} parent=67 // pred_check
          %p581 = pneg %p130
        $region82: #{tpu_custom_call.1} parent=67 // pred_check_branch
          %583 = sbr.rel (%p581) target = $region84
        $region83: #{tpu_custom_call.1} parent=67 // pred_region
          %p584 = scmp.lt.s32.totalorder %s32, 1
          %s585 = scalar_select %p584, %s32, 1
          %s586 = smul.addr %s585, 8
          %s587 = scalar_lea.vmem %s3, %s586
        $region84: #{tpu_custom_call.1} parent=67 // pred_fallthru
          _
      $region68: #{tpu_custom_call.1} parent=5 // pred_fallthru
        _
      %p588 = scmp.le.s32.totalorder 1, %s32
      %p589 = scmp.lt.s32.totalorder %s32, 3
      %p590 = pnand %p588, %p589
      %p591 = pneg %p590
      // Predicated region
      $region85: #{tpu_custom_call.1} parent=5 // pred_check
        _
      $region86: #{tpu_custom_call.1} parent=5 // pred_check_branch
        %593 = sbr.rel (%p590) target = $region88
      $region87: #{tpu_custom_call.1} parent=5 // pred_region
        %s594 = ssub.s32 %s32, 1
        %s595 = sand.u32 %s97, 1
        %s596 = scalar_lea.sflag [#allocation3], %s595
        %s597 = sand.u32 %s97, 1
        %s598 = smul.addr %s597, 8
        %s599 = scalar_lea.vmem [#allocation2], %s598
        // Predicated region
        $region89: #{tpu_custom_call.1} parent=87 // pred_check
          %p600 = pneg %p110
        $region90: #{tpu_custom_call.1} parent=87 // pred_check_branch
          %602 = sbr.rel (%p600) target = $region92
        $region91: #{tpu_custom_call.1} parent=87 // pred_region
          %603 = dma.done %s596, 128
        $region92: #{tpu_custom_call.1} parent=87 // pred_fallthru
          _
        // Predicated region
        $region93: #{tpu_custom_call.1} parent=87 // pred_check
          %p604 = pneg %p178
        $region94: #{tpu_custom_call.1} parent=87 // pred_check_branch
          %606 = sbr.rel (%p604) target = $region96
        $region95: #{tpu_custom_call.1} parent=87 // pred_region
          %607 = dma.done [#allocation6], 16
        $region96: #{tpu_custom_call.1} parent=87 // pred_fallthru
          _
        // Predicated region
        $region97: #{tpu_custom_call.1} parent=87 // pred_check
          %p608 = pneg %p199
        $region98: #{tpu_custom_call.1} parent=87 // pred_check_branch
          %610 = sbr.rel (%p608) target = $region100
        $region99: #{tpu_custom_call.1} parent=87 // pred_region
          %611 = dma.done [#allocation6], 256
        $region100: #{tpu_custom_call.1} parent=87 // pred_fallthru
          _
        // Predicated region
        $region101: #{tpu_custom_call.1} parent=87 // pred_check
          %p612 = pneg %p220
        $region102: #{tpu_custom_call.1} parent=87 // pred_check_branch
          %614 = sbr.rel (%p612) target = $region104
        $region103: #{tpu_custom_call.1} parent=87 // pred_region
          %615 = dma.done [#allocation9], 16
        $region104: #{tpu_custom_call.1} parent=87 // pred_fallthru
          _
        // Predicated region
        $region105: #{tpu_custom_call.1} parent=87 // pred_check
          %p616 = pneg %p304
        $region106: #{tpu_custom_call.1} parent=87 // pred_check_branch
          %618 = sbr.rel (%p616) target = $region108
        $region107: #{tpu_custom_call.1} parent=87 // pred_region
          %619 = dma.done [#allocation9], 256
        $region108: #{tpu_custom_call.1} parent=87 // pred_fallthru
          _
        // Predicated region
        $region109: #{tpu_custom_call.1} parent=87 // pred_check
          %p620 = pneg %p346
        $region110: #{tpu_custom_call.1} parent=87 // pred_check_branch
          %622 = sbr.rel (%p620) target = $region112
        $region111: #{tpu_custom_call.1} parent=87 // pred_region
          %623 = dma.done [#allocation12], 256
        $region112: #{tpu_custom_call.1} parent=87 // pred_fallthru
          _
        // Predicated region
        $region113: #{tpu_custom_call.1} parent=87 // pred_check
          %p624 = pneg %p388
        $region114: #{tpu_custom_call.1} parent=87 // pred_check_branch
          %626 = sbr.rel (%p624) target = $region116
        $region115: #{tpu_custom_call.1} parent=87 // pred_region
          %627 = dma.done [#allocation12], 256
        $region116: #{tpu_custom_call.1} parent=87 // pred_fallthru
          _
        %p628 = scmp.lt.s32.totalorder %s37, 1
        %s629 = scalar_select %p628, %s37, 1
        %s630 = smul.addr %s629, 8
        %s631 = scalar_lea.vmem %s0, %s630
        %p632 = pneg %p58
        %p633 = pneg %p55
        %p634 = scmp.lt.s32.totalorder %s37, 1
        %s635 = scalar_select %p634, %s37, 1
        %s636 = smul.addr %s635, 8
        %s637 = scalar_lea.vmem %s1, %s636
        %p638 = pneg %p84
        %p639 = pneg %p81
        %s640 = sand.u32 %s97, 1
        %s641 = scalar_lea.sflag [#allocation3], %s640
        %s642 = sand.u32 %s97, 1
        %s643 = smul.addr %s642, 8
        %s644 = scalar_lea.vmem [#allocation2], %s643
        %p645 = pneg %p110
        %p646 = pneg %p107
        %p647 = scmp.lt.s32.totalorder %s37, 1
        %s648 = scalar_select %p647, %s37, 1
        %s649 = smul.addr %s648, 8
        %s650 = scalar_lea.vmem %s3, %s649
        %p651 = pneg %p136
        %p652 = pneg %p133
        %p653 = pneg %p157
        %p654 = pneg %p154
        %p655 = pneg %p178
        %p656 = pneg %p175
        %p657 = pneg %p199
        %p658 = pneg %p196
        %p659 = pneg %p220
        %p660 = pneg %p217
        %p661 = pneg %p241
        %p662 = pneg %p238
        %p663 = pneg %p262
        %p664 = pneg %p259
        %p665 = pneg %p283
        %p666 = pneg %p280
        %p667 = pneg %p304
        %p668 = pneg %p301
        %p669 = pneg %p325
        %p670 = pneg %p322
        %p671 = pneg %p346
        %p672 = pneg %p343
        %p673 = pneg %p367
        %p674 = pneg %p364
        %p675 = pneg %p388
        %p676 = pneg %p385
        %p677 = pneg %p409
        %p678 = pneg %p406
        %p679 = pneg %p435
        %p680 = pneg %p432
        %s681 = sand.u32 %s422, 1
        %s682 = scalar_lea.sflag [#allocation4], %s681
        %s683 = sand.u32 %s422, 1
        %s684 = smul.addr %s683, 8
        %s685 = scalar_lea.vmem [#allocation14], %s684
        %p686 = scmp.lt.s32.totalorder %s37, 1
        %s687 = scalar_select %p686, %s37, 1
        %s688 = smul.addr %s687, 8
        %s689 = scalar_lea.vmem %s0, %s688
        %p690 = scmp.lt.s32.totalorder %s37, 1
        %s691 = scalar_select %p690, %s37, 1
        %s692 = smul.addr %s691, 8
        %s693 = scalar_lea.vmem %s1, %s692
        %p694 = scmp.lt.s32.totalorder %s37, 1
        %s695 = scalar_select %p694, %s37, 1
        %s696 = smul.addr %s695, 8
        %s697 = scalar_lea.vmem %s3, %s696
        %v699 = vld [vmem:[%s689] sm:$0xff]
        %v700 = vld [vmem:[%s693] sm:$0xff]
        %v701 = vld [vmem:[%s599] sm:$0xff]
        %v702 = vld [vmem:[%s4] sm:$0xf]
        %v703 = vld [vmem:[%s4 + $0x4] sm:$0xf]
        %v704 = vld [vmem:[%s4 + $0x8] sm:$0xf]
        %v705 = vld [vmem:[%s4 + $0xc] sm:$0xf]
        %v706 = vpack.c.bf16 %v699, %v699
        %v707 = vld [vmem:[#allocation5] sm:$0x1]
        %v709 = vlaneseq
        %v710 = vshrl.u32 %v709, 7
        %v711 = vsub.s32 0, %v710
        %v712 = vrot.slane %v707, %v711
        %v718 = vunpack.c.l.b16 %v702
        %v719 = vunpack.c.l.b16 %v703
        %v720 = vunpack.c.l.b16 %v704
        %v721 = vunpack.c.l.b16 %v705
        %v722 = vpack.c.b16 %v719, %v718
        %v723 = vpack.c.b16 %v721, %v720
        %vm726 = vcmask 261120
        %v728 = vsel %vm726, %v706, 0
        %730 = vmatprep.subr.bf16.mxu0 0
        %731 = vmatpush1.bf16.msra.mxu0 0
        %732 = vmatprep.subr.bf16.mxu0 0
        %733 = vmatpush1.bf16.msra.mxu0 0
        %734 = vmatprep.subr.bf16.mxu0 0
        %735 = vmatpush1.bf16.msra.mxu0 0
        %736 = vmatprep.subr.bf16.mxu0 0
        %737 = vmatpush1.bf16.msra.mxu0 0
        %738 = vmatprep.subr.bf16.mxu0 0
        %739 = vmatpush1.bf16.msra.mxu0 0
        %740 = vmatprep.subr.bf16.mxu0 0
        %741 = vmatpush1.bf16.msra.mxu0 0
        %742 = vmatprep.subr.bf16.mxu0 0
        %743 = vmatpush1.bf16.msra.mxu0 %v723
        %744 = vmatprep.subr.bf16.mxu0 0
        %745 = vmatpush1.bf16.msra.mxu0 %v722
        %746 = vmatprep.subr.bf16.mxu0 0
        %747 = vmatpush2.bf16.msra.mxu0 0
        %748 = vmatprep.subr.bf16.mxu0 0
        %749 = vmatpush2.bf16.msra.mxu0 0
        %750 = vmatprep.subr.bf16.mxu0 0
        %751 = vmatpush2.bf16.msra.mxu0 0
        %752 = vmatprep.subr.bf16.mxu0 0
        %753 = vmatpush2.bf16.msra.mxu0 0
        %754 = vmatprep.subr.bf16.mxu0 0
        %755 = vmatpush2.bf16.msra.mxu0 0
        %756 = vmatprep.subr.bf16.mxu0 0
        %757 = vmatpush2.bf16.msra.mxu0 0
        %758 = vmatprep.subr.bf16.mxu0 0
        %759 = vmatpush2.bf16.msra.mxu0 0
        %760 = vmatprep.subr.bf16.mxu0 0
        %761 = vmatpush2.bf16.msra.mxu0 0
        %762 = vmatprep.mubr.bf16.mxu0 0
        %763 = vmatmul.mubr.bf16.gmra.mxu0 %v728
        %v764 = vpop.f32.mrf.mxu0
        %v765 = vadd.f32 %v712, %v764
        %v766 = vpop.f32.mrf.mxu0
        %v767 = vpop.f32.mrf.mxu0
        %v768 = vpop.f32.mrf.mxu0
        %769 = vdwg.mxu0
        %v770 = vxor.u32 %v765, 2147483648
        %v771 = vmul.f32 %v770, 1.442695
        %v772 = vpow.pop %v771
        %v773 = vadd.f32 %v772, 1.0
        %v774 = vrcp.pop %v773
        %v775 = vmul.f32 1.0, %v774
        %v776 = vlaneseq
        %v777 = vand.u32 %v776, 127
        %v778 = vlaneseq
        %v779 = vshrl.u32 %v778, 7
        %vm780 = vcmp.ge.s32.totalorder %v777, %v779
        %v781 = vadd.s32 %v779, 1
        %vm782 = vcmp.lt.s32.totalorder %v777, %v781
        %vm783 = vmand %vm780, %vm782
        %v784 = vsel %vm783, 1, 0
        %v785 = vcvt.s32.f32 %v784
        %v786 = vld [vmem:[%s10] sm:$0x1]
        %v787 = vadd.f32 %v786, 0.0
        %v789 = vlaneseq
        %v790 = vshrl.u32 %v789, 7
        %v791 = vsub.s32 0, %v790
        %v792 = vrot.slane %v787, %v791
        %vm794 = vcmask 64512
        %v796 = vsel %vm794, %v785, 0
        %798 = vmatprep.subr.mxu0 0.0
        %799 = vmatpush1.msra.mxu0 0.0
        %800 = vmatprep.subr.mxu0 0.0
        %801 = vmatpush1.msra.mxu0 0.0
        %802 = vmatprep.subr.mxu0 0.0
        %803 = vmatpush1.msra.mxu0 0.0
        %804 = vmatprep.subr.mxu0 0.0
        %805 = vmatpush1.msra.mxu0 0.0
        %806 = vmatprep.subr.mxu0 0.0
        %807 = vmatpush1.msra.mxu0 0.0
        %808 = vmatprep.subr.mxu0 0.0
        %809 = vmatpush1.msra.mxu0 0.0
        %810 = vmatprep.subr.mxu0 0.0
        %811 = vmatpush1.msra.mxu0 0.0
        %812 = vmatprep.subr.mxu0 0.0
        %813 = vmatpush1.msra.mxu0 0.0
        %814 = vmatprep.subr.mxu0 0.0
        %815 = vmatpush1.msra.mxu0 0.0
        %816 = vmatprep.subr.mxu0 0.0
        %817 = vmatpush1.msra.mxu0 0.0
        %818 = vmatprep.subr.mxu0 0.0
        %819 = vmatpush1.msra.mxu0 0.0
        %820 = vmatprep.subr.mxu0 0.0
        %821 = vmatpush1.msra.mxu0 0.0
        %822 = vmatprep.subr.mxu0 0.0
        %823 = vmatpush1.msra.mxu0 0.0
        %824 = vmatprep.subr.mxu0 0.0
        %825 = vmatpush1.msra.mxu0 0.0
        %826 = vmatprep.subr.mxu0 0.0
        %827 = vmatpush1.msra.mxu0 0.0
        %828 = vmatprep.subr.mxu0 0.0
        %829 = vmatpush1.msra.mxu0 %v700
        %830 = vmatprep.subr.mxu0 0.0
        %831 = vmatpush2.msra.mxu0 0.0
        %832 = vmatprep.subr.mxu0 0.0
        %833 = vmatpush2.msra.mxu0 0.0
        %834 = vmatprep.subr.mxu0 0.0
        %835 = vmatpush2.msra.mxu0 0.0
        %836 = vmatprep.subr.mxu0 0.0
        %837 = vmatpush2.msra.mxu0 0.0
        %838 = vmatprep.subr.mxu0 0.0
        %839 = vmatpush2.msra.mxu0 0.0
        %840 = vmatprep.subr.mxu0 0.0
        %841 = vmatpush2.msra.mxu0 0.0
        %842 = vmatprep.subr.mxu0 0.0
        %843 = vmatpush2.msra.mxu0 0.0
        %844 = vmatprep.subr.mxu0 0.0
        %845 = vmatpush2.msra.mxu0 0.0
        %846 = vmatprep.subr.mxu0 0.0
        %847 = vmatpush2.msra.mxu0 0.0
        %848 = vmatprep.subr.mxu0 0.0
        %849 = vmatpush2.msra.mxu0 0.0
        %850 = vmatprep.subr.mxu0 0.0
        %851 = vmatpush2.msra.mxu0 0.0
        %852 = vmatprep.subr.mxu0 0.0
        %853 = vmatpush2.msra.mxu0 0.0
        %854 = vmatprep.subr.mxu0 0.0
        %855 = vmatpush2.msra.mxu0 0.0
        %856 = vmatprep.subr.mxu0 0.0
        %857 = vmatpush2.msra.mxu0 0.0
        %858 = vmatprep.subr.mxu0 0.0
        %859 = vmatpush2.msra.mxu0 0.0
        %860 = vmatprep.subr.mxu0 0.0
        %861 = vmatpush2.msra.mxu0 0.0
        %862 = vmatprep.mubr.f32.mxu0 0.0
        %863 = vmatmul.mubr.f32.gmra.mxu0 %v796
        %v864 = vpop.f32.mrf.mxu0
        %v865 = vadd.f32 %v792, %v864
        %v866 = vpop.f32.mrf.mxu0
        %867 = vdwg.mxu0
        %v868 = vld [vmem:[#allocation7] sm:$0xf]
        %v869 = vld [vmem:[#allocation7 + $0x4] sm:$0xf]
        %v870 = vld [vmem:[#allocation7 + $0x8] sm:$0xf]
        %v871 = vld [vmem:[#allocation7 + $0xc] sm:$0xf]
        %v872 = vpack.c.bf16 %v865, %v865
        %v873 = vld [vmem:[#allocation8] sm:$0x1]
        %v875 = vlaneseq
        %v876 = vshrl.u32 %v875, 7
        %v877 = vsub.s32 0, %v876
        %v878 = vrot.slane %v873, %v877
        %v884 = vunpack.c.l.b16 %v868
        %v885 = vunpack.c.l.b16 %v869
        %v886 = vunpack.c.l.b16 %v870
        %v887 = vunpack.c.l.b16 %v871
        %v888 = vpack.c.b16 %v885, %v884
        %v889 = vpack.c.b16 %v887, %v886
        %v893 = vsel %vm726, %v872, 0
        %895 = vmatprep.subr.bf16.mxu0 0
        %896 = vmatpush1.bf16.msra.mxu0 0
        %897 = vmatprep.subr.bf16.mxu0 0
        %898 = vmatpush1.bf16.msra.mxu0 0
        %899 = vmatprep.subr.bf16.mxu0 0
        %900 = vmatpush1.bf16.msra.mxu0 0
        %901 = vmatprep.subr.bf16.mxu0 0
        %902 = vmatpush1.bf16.msra.mxu0 0
        %903 = vmatprep.subr.bf16.mxu0 0
        %904 = vmatpush1.bf16.msra.mxu0 0
        %905 = vmatprep.subr.bf16.mxu0 0
        %906 = vmatpush1.bf16.msra.mxu0 0
        %907 = vmatprep.subr.bf16.mxu0 0
        %908 = vmatpush1.bf16.msra.mxu0 %v889
        %909 = vmatprep.subr.bf16.mxu0 0
        %910 = vmatpush1.bf16.msra.mxu0 %v888
        %911 = vmatprep.subr.bf16.mxu0 0
        %912 = vmatpush2.bf16.msra.mxu0 0
        %913 = vmatprep.subr.bf16.mxu0 0
        %914 = vmatpush2.bf16.msra.mxu0 0
        %915 = vmatprep.subr.bf16.mxu0 0
        %916 = vmatpush2.bf16.msra.mxu0 0
        %917 = vmatprep.subr.bf16.mxu0 0
        %918 = vmatpush2.bf16.msra.mxu0 0
        %919 = vmatprep.subr.bf16.mxu0 0
        %920 = vmatpush2.bf16.msra.mxu0 0
        %921 = vmatprep.subr.bf16.mxu0 0
        %922 = vmatpush2.bf16.msra.mxu0 0
        %923 = vmatprep.subr.bf16.mxu0 0
        %924 = vmatpush2.bf16.msra.mxu0 0
        %925 = vmatprep.subr.bf16.mxu0 0
        %926 = vmatpush2.bf16.msra.mxu0 0
        %927 = vmatprep.mubr.bf16.mxu0 0
        %928 = vmatmul.mubr.bf16.gmra.mxu0 %v893
        %v929 = vpop.f32.mrf.mxu0
        %v930 = vadd.f32 %v878, %v929
        %v931 = vpop.f32.mrf.mxu0
        %v932 = vpop.f32.mrf.mxu0
        %v933 = vpop.f32.mrf.mxu0
        %934 = vdwg.mxu0
        %v935 = vxor.u32 %v930, 2147483648
        %v936 = vmul.f32 %v935, 1.442695
        %v937 = vpow.pop %v936
        %v938 = vadd.f32 %v937, 1.0
        %v939 = vrcp.pop %v938
        %v940 = vmul.f32 1.0, %v939
        %v941 = vld [vmem:[%s8] sm:$0xf]
        %v942 = vld [vmem:[%s8 + $0x4] sm:$0xf]
        %v943 = vld [vmem:[%s8 + $0x8] sm:$0xf]
        %v944 = vld [vmem:[%s8 + $0xc] sm:$0xf]
        %v945 = vpack.c.bf16 %v940, %v940
        %v946 = vld [vmem:[%s9] sm:$0x1]
        %v948 = vlaneseq
        %v949 = vshrl.u32 %v948, 7
        %v950 = vsub.s32 0, %v949
        %v951 = vrot.slane %v946, %v950
        %v957 = vunpack.c.l.b16 %v941
        %v958 = vunpack.c.l.b16 %v942
        %v959 = vunpack.c.l.b16 %v943
        %v960 = vunpack.c.l.b16 %v944
        %v961 = vpack.c.b16 %v958, %v957
        %v962 = vpack.c.b16 %v960, %v959
        %v966 = vsel %vm726, %v945, 0
        %968 = vmatprep.subr.bf16.mxu0 0
        %969 = vmatpush1.bf16.msra.mxu0 0
        %970 = vmatprep.subr.bf16.mxu0 0
        %971 = vmatpush1.bf16.msra.mxu0 0
        %972 = vmatprep.subr.bf16.mxu0 0
        %973 = vmatpush1.bf16.msra.mxu0 0
        %974 = vmatprep.subr.bf16.mxu0 0
        %975 = vmatpush1.bf16.msra.mxu0 0
        %976 = vmatprep.subr.bf16.mxu0 0
        %977 = vmatpush1.bf16.msra.mxu0 0
        %978 = vmatprep.subr.bf16.mxu0 0
        %979 = vmatpush1.bf16.msra.mxu0 0
        %980 = vmatprep.subr.bf16.mxu0 0
        %981 = vmatpush1.bf16.msra.mxu0 %v962
        %982 = vmatprep.subr.bf16.mxu0 0
        %983 = vmatpush1.bf16.msra.mxu0 %v961
        %984 = vmatprep.subr.bf16.mxu0 0
        %985 = vmatpush2.bf16.msra.mxu0 0
        %986 = vmatprep.subr.bf16.mxu0 0
        %987 = vmatpush2.bf16.msra.mxu0 0
        %988 = vmatprep.subr.bf16.mxu0 0
        %989 = vmatpush2.bf16.msra.mxu0 0
        %990 = vmatprep.subr.bf16.mxu0 0
        %991 = vmatpush2.bf16.msra.mxu0 0
        %992 = vmatprep.subr.bf16.mxu0 0
        %993 = vmatpush2.bf16.msra.mxu0 0
        %994 = vmatprep.subr.bf16.mxu0 0
        %995 = vmatpush2.bf16.msra.mxu0 0
        %996 = vmatprep.subr.bf16.mxu0 0
        %997 = vmatpush2.bf16.msra.mxu0 0
        %998 = vmatprep.subr.bf16.mxu0 0
        %999 = vmatpush2.bf16.msra.mxu0 0
        %1000 = vmatprep.mubr.bf16.mxu0 0
        %1001 = vmatmul.mubr.bf16.gmra.mxu0 %v966
        %v1002 = vpop.f32.mrf.mxu0
        %v1003 = vadd.f32 %v951, %v1002
        %v1004 = vpop.f32.mrf.mxu0
        %v1005 = vpop.f32.mrf.mxu0
        %v1006 = vpop.f32.mrf.mxu0
        %1007 = vdwg.mxu0
        %v1008 = vld [vmem:[%s697] sm:$0xff]
        %1009 = vset.pattern.permute.xlu0 0
        %1010 = vperm.xlu0 %1009, %v1008
        %v1011 = vpop.permute.xlu0 %1010
        %vm1012 = vcmp.eq.s32.totalorder %v777, %v1011
        %v1013 = vsel %vm1012, 1, 0
        %v1014 = vcvt.s32.f32 %v1013
        %v1016 = vsel %vm794, %v1014, 0
        %1018 = vmatprep.subr.mxu0 0.0
        %1019 = vmatpush1.msra.mxu0 0.0
        %1020 = vmatprep.subr.mxu0 0.0
        %1021 = vmatpush1.msra.mxu0 0.0
        %1022 = vmatprep.subr.mxu0 0.0
        %1023 = vmatpush1.msra.mxu0 0.0
        %1024 = vmatprep.subr.mxu0 0.0
        %1025 = vmatpush1.msra.mxu0 0.0
        %1026 = vmatprep.subr.mxu0 0.0
        %1027 = vmatpush1.msra.mxu0 0.0
        %1028 = vmatprep.subr.mxu0 0.0
        %1029 = vmatpush1.msra.mxu0 0.0
        %1030 = vmatprep.subr.mxu0 0.0
        %1031 = vmatpush1.msra.mxu0 0.0
        %1032 = vmatprep.subr.mxu0 0.0
        %1033 = vmatpush1.msra.mxu0 0.0
        %1034 = vmatprep.subr.mxu0 0.0
        %1035 = vmatpush1.msra.mxu0 0.0
        %1036 = vmatprep.subr.mxu0 0.0
        %1037 = vmatpush1.msra.mxu0 0.0
        %1038 = vmatprep.subr.mxu0 0.0
        %1039 = vmatpush1.msra.mxu0 0.0
        %1040 = vmatprep.subr.mxu0 0.0
        %1041 = vmatpush1.msra.mxu0 0.0
        %1042 = vmatprep.subr.mxu0 0.0
        %1043 = vmatpush1.msra.mxu0 0.0
        %1044 = vmatprep.subr.mxu0 0.0
        %1045 = vmatpush1.msra.mxu0 0.0
        %1046 = vmatprep.subr.mxu0 0.0
        %1047 = vmatpush1.msra.mxu0 0.0
        %1048 = vmatprep.subr.mxu0 0.0
        %1049 = vmatpush1.msra.mxu0 %v700
        %1050 = vmatprep.subr.mxu0 0.0
        %1051 = vmatpush2.msra.mxu0 0.0
        %1052 = vmatprep.subr.mxu0 0.0
        %1053 = vmatpush2.msra.mxu0 0.0
        %1054 = vmatprep.subr.mxu0 0.0
        %1055 = vmatpush2.msra.mxu0 0.0
        %1056 = vmatprep.subr.mxu0 0.0
        %1057 = vmatpush2.msra.mxu0 0.0
        %1058 = vmatprep.subr.mxu0 0.0
        %1059 = vmatpush2.msra.mxu0 0.0
        %1060 = vmatprep.subr.mxu0 0.0
        %1061 = vmatpush2.msra.mxu0 0.0
        %1062 = vmatprep.subr.mxu0 0.0
        %1063 = vmatpush2.msra.mxu0 0.0
        %1064 = vmatprep.subr.mxu0 0.0
        %1065 = vmatpush2.msra.mxu0 0.0
        %1066 = vmatprep.subr.mxu0 0.0
        %1067 = vmatpush2.msra.mxu0 0.0
        %1068 = vmatprep.subr.mxu0 0.0
        %1069 = vmatpush2.msra.mxu0 0.0
        %1070 = vmatprep.subr.mxu0 0.0
        %1071 = vmatpush2.msra.mxu0 0.0
        %1072 = vmatprep.subr.mxu0 0.0
        %1073 = vmatpush2.msra.mxu0 0.0
        %1074 = vmatprep.subr.mxu0 0.0
        %1075 = vmatpush2.msra.mxu0 0.0
        %1076 = vmatprep.subr.mxu0 0.0
        %1077 = vmatpush2.msra.mxu0 0.0
        %1078 = vmatprep.subr.mxu0 0.0
        %1079 = vmatpush2.msra.mxu0 0.0
        %1080 = vmatprep.subr.mxu0 0.0
        %1081 = vmatpush2.msra.mxu0 0.0
        %1082 = vmatprep.mubr.f32.mxu0 0.0
        %1083 = vmatmul.mubr.f32.gmra.mxu0 %v1016
        %v1084 = vpop.f32.mrf.mxu0
        %v1085 = vadd.f32 0.0, %v1084
        %v1086 = vpop.f32.mrf.mxu0
        %1087 = vdwg.mxu0
        %v1088 = vld [vmem:[#allocation10] sm:$0xf]
        %v1089 = vld [vmem:[#allocation10 + $0x4] sm:$0xf]
        %v1090 = vld [vmem:[#allocation10 + $0x8] sm:$0xf]
        %v1091 = vld [vmem:[#allocation10 + $0xc] sm:$0xf]
        %v1092 = vld [vmem:[%s12] sm:$0x1]
        %v1094 = vlaneseq
        %v1095 = vshrl.u32 %v1094, 7
        %v1096 = vsub.s32 0, %v1095
        %v1097 = vrot.slane %v1092, %v1096
        %v1103 = vunpack.c.l.b16 %v1088
        %v1104 = vunpack.c.l.b16 %v1089
        %v1105 = vunpack.c.l.b16 %v1090
        %v1106 = vunpack.c.l.b16 %v1091
        %v1107 = vpack.c.b16 %v1104, %v1103
        %v1108 = vpack.c.b16 %v1106, %v1105
        %1111 = vmatprep.subr.bf16.mxu0 0
        %1112 = vmatpush1.bf16.msra.mxu0 0
        %1113 = vmatprep.subr.bf16.mxu0 0
        %1114 = vmatpush1.bf16.msra.mxu0 0
        %1115 = vmatprep.subr.bf16.mxu0 0
        %1116 = vmatpush1.bf16.msra.mxu0 0
        %1117 = vmatprep.subr.bf16.mxu0 0
        %1118 = vmatpush1.bf16.msra.mxu0 0
        %1119 = vmatprep.subr.bf16.mxu0 0
        %1120 = vmatpush1.bf16.msra.mxu0 0
        %1121 = vmatprep.subr.bf16.mxu0 0
        %1122 = vmatpush1.bf16.msra.mxu0 0
        %1123 = vmatprep.subr.bf16.mxu0 0
        %1124 = vmatpush1.bf16.msra.mxu0 %v1108
        %1125 = vmatprep.subr.bf16.mxu0 0
        %1126 = vmatpush1.bf16.msra.mxu0 %v1107
        %1127 = vmatprep.subr.bf16.mxu0 0
        %1128 = vmatpush2.bf16.msra.mxu0 0
        %1129 = vmatprep.subr.bf16.mxu0 0
        %1130 = vmatpush2.bf16.msra.mxu0 0
        %1131 = vmatprep.subr.bf16.mxu0 0
        %1132 = vmatpush2.bf16.msra.mxu0 0
        %1133 = vmatprep.subr.bf16.mxu0 0
        %1134 = vmatpush2.bf16.msra.mxu0 0
        %1135 = vmatprep.subr.bf16.mxu0 0
        %1136 = vmatpush2.bf16.msra.mxu0 0
        %1137 = vmatprep.subr.bf16.mxu0 0
        %1138 = vmatpush2.bf16.msra.mxu0 0
        %1139 = vmatprep.subr.bf16.mxu0 0
        %1140 = vmatpush2.bf16.msra.mxu0 0
        %1141 = vmatprep.subr.bf16.mxu0 0
        %1142 = vmatpush2.bf16.msra.mxu0 0
        %1143 = vmatprep.mubr.bf16.mxu0 0
        %1144 = vmatmul.mubr.bf16.gmra.mxu0 %v728
        %v1145 = vpop.f32.mrf.mxu0
        %v1146 = vadd.f32 %v1097, %v1145
        %v1147 = vpop.f32.mrf.mxu0
        %v1148 = vpop.f32.mrf.mxu0
        %v1149 = vpop.f32.mrf.mxu0
        %1150 = vdwg.mxu0
        %v1151 = vld [vmem:[#allocation11] sm:$0xf]
        %v1152 = vld [vmem:[#allocation11 + $0x4] sm:$0xf]
        %v1153 = vld [vmem:[#allocation11 + $0x8] sm:$0xf]
        %v1154 = vld [vmem:[#allocation11 + $0xc] sm:$0xf]
        %v1155 = vpack.c.bf16 %v700, %v700
        %v1156 = vld [vmem:[%s14] sm:$0x1]
        %v1158 = vlaneseq
        %v1159 = vshrl.u32 %v1158, 7
        %v1160 = vsub.s32 0, %v1159
        %v1161 = vrot.slane %v1156, %v1160
        %v1167 = vunpack.c.l.b16 %v1151
        %v1168 = vunpack.c.l.b16 %v1152
        %v1169 = vunpack.c.l.b16 %v1153
        %v1170 = vunpack.c.l.b16 %v1154
        %v1171 = vpack.c.b16 %v1168, %v1167
        %v1172 = vpack.c.b16 %v1170, %v1169
        %v1176 = vsel %vm726, %v1155, 0
        %1178 = vmatprep.subr.bf16.mxu0 0
        %1179 = vmatpush1.bf16.msra.mxu0 0
        %1180 = vmatprep.subr.bf16.mxu0 0
        %1181 = vmatpush1.bf16.msra.mxu0 0
        %1182 = vmatprep.subr.bf16.mxu0 0
        %1183 = vmatpush1.bf16.msra.mxu0 0
        %1184 = vmatprep.subr.bf16.mxu0 0
        %1185 = vmatpush1.bf16.msra.mxu0 0
        %1186 = vmatprep.subr.bf16.mxu0 0
        %1187 = vmatpush1.bf16.msra.mxu0 0
        %1188 = vmatprep.subr.bf16.mxu0 0
        %1189 = vmatpush1.bf16.msra.mxu0 0
        %1190 = vmatprep.subr.bf16.mxu0 0
        %1191 = vmatpush1.bf16.msra.mxu0 %v1172
        %1192 = vmatprep.subr.bf16.mxu0 0
        %1193 = vmatpush1.bf16.msra.mxu0 %v1171
        %1194 = vmatprep.subr.bf16.mxu0 0
        %1195 = vmatpush2.bf16.msra.mxu0 0
        %1196 = vmatprep.subr.bf16.mxu0 0
        %1197 = vmatpush2.bf16.msra.mxu0 0
        %1198 = vmatprep.subr.bf16.mxu0 0
        %1199 = vmatpush2.bf16.msra.mxu0 0
        %1200 = vmatprep.subr.bf16.mxu0 0
        %1201 = vmatpush2.bf16.msra.mxu0 0
        %1202 = vmatprep.subr.bf16.mxu0 0
        %1203 = vmatpush2.bf16.msra.mxu0 0
        %1204 = vmatprep.subr.bf16.mxu0 0
        %1205 = vmatpush2.bf16.msra.mxu0 0
        %1206 = vmatprep.subr.bf16.mxu0 0
        %1207 = vmatpush2.bf16.msra.mxu0 0
        %1208 = vmatprep.subr.bf16.mxu0 0
        %1209 = vmatpush2.bf16.msra.mxu0 0
        %1210 = vmatprep.mubr.bf16.mxu0 0
        %1211 = vmatmul.mubr.bf16.gmra.mxu0 %v1176
        %v1212 = vpop.f32.mrf.mxu0
        %v1213 = vadd.f32 %v1161, %v1212
        %v1214 = vpop.f32.mrf.mxu0
        %v1215 = vpop.f32.mrf.mxu0
        %v1216 = vpop.f32.mrf.mxu0
        %1217 = vdwg.mxu0
        %v1218 = vld [vmem:[#allocation13] sm:$0xf]
        %v1219 = vld [vmem:[#allocation13 + $0x4] sm:$0xf]
        %v1220 = vld [vmem:[#allocation13 + $0x8] sm:$0xf]
        %v1221 = vld [vmem:[#allocation13 + $0xc] sm:$0xf]
        %v1222 = vpack.c.bf16 %v701, %v701
        %v1223 = vld [vmem:[%s16] sm:$0x1]
        %v1225 = vlaneseq
        %v1226 = vshrl.u32 %v1225, 7
        %v1227 = vsub.s32 0, %v1226
        %v1228 = vrot.slane %v1223, %v1227
        %v1234 = vunpack.c.l.b16 %v1218
        %v1235 = vunpack.c.l.b16 %v1219
        %v1236 = vunpack.c.l.b16 %v1220
        %v1237 = vunpack.c.l.b16 %v1221
        %v1238 = vpack.c.b16 %v1235, %v1234
        %v1239 = vpack.c.b16 %v1237, %v1236
        %v1243 = vsel %vm726, %v1222, 0
        %1245 = vmatprep.subr.bf16.mxu0 0
        %1246 = vmatpush1.bf16.msra.mxu0 0
        %1247 = vmatprep.subr.bf16.mxu0 0
        %1248 = vmatpush1.bf16.msra.mxu0 0
        %1249 = vmatprep.subr.bf16.mxu0 0
        %1250 = vmatpush1.bf16.msra.mxu0 0
        %1251 = vmatprep.subr.bf16.mxu0 0
        %1252 = vmatpush1.bf16.msra.mxu0 0
        %1253 = vmatprep.subr.bf16.mxu0 0
        %1254 = vmatpush1.bf16.msra.mxu0 0
        %1255 = vmatprep.subr.bf16.mxu0 0
        %1256 = vmatpush1.bf16.msra.mxu0 0
        %1257 = vmatprep.subr.bf16.mxu0 0
        %1258 = vmatpush1.bf16.msra.mxu0 %v1239
        %1259 = vmatprep.subr.bf16.mxu0 0
        %1260 = vmatpush1.bf16.msra.mxu0 %v1238
        %1261 = vmatprep.subr.bf16.mxu0 0
        %1262 = vmatpush2.bf16.msra.mxu0 0
        %1263 = vmatprep.subr.bf16.mxu0 0
        %1264 = vmatpush2.bf16.msra.mxu0 0
        %1265 = vmatprep.subr.bf16.mxu0 0
        %1266 = vmatpush2.bf16.msra.mxu0 0
        %1267 = vmatprep.subr.bf16.mxu0 0
        %1268 = vmatpush2.bf16.msra.mxu0 0
        %1269 = vmatprep.subr.bf16.mxu0 0
        %1270 = vmatpush2.bf16.msra.mxu0 0
        %1271 = vmatprep.subr.bf16.mxu0 0
        %1272 = vmatpush2.bf16.msra.mxu0 0
        %1273 = vmatprep.subr.bf16.mxu0 0
        %1274 = vmatpush2.bf16.msra.mxu0 0
        %1275 = vmatprep.subr.bf16.mxu0 0
        %1276 = vmatpush2.bf16.msra.mxu0 0
        %1277 = vmatprep.mubr.bf16.mxu0 0
        %1278 = vmatmul.mubr.bf16.gmra.mxu0 %v1243
        %v1279 = vpop.f32.mrf.mxu0
        %v1280 = vadd.f32 %v1228, %v1279
        %v1281 = vpop.f32.mrf.mxu0
        %v1282 = vpop.f32.mrf.mxu0
        %v1283 = vpop.f32.mrf.mxu0
        %1284 = vdwg.mxu0
        %vm1285 = vcmp.eq.s32.totalorder %v777, %v779
        %v1286 = vsel %vm1285, 1, 0
        %v1287 = vcvt.s32.f32 %v1286
        %v1289 = vsel %vm794, %v1287, 0
        %1291 = vmatprep.subr.mxu0 0.0
        %1292 = vmatpush1.msra.mxu0 0.0
        %1293 = vmatprep.subr.mxu0 0.0
        %1294 = vmatpush1.msra.mxu0 0.0
        %1295 = vmatprep.subr.mxu0 0.0
        %1296 = vmatpush1.msra.mxu0 0.0
        %1297 = vmatprep.subr.mxu0 0.0
        %1298 = vmatpush1.msra.mxu0 0.0
        %1299 = vmatprep.subr.mxu0 0.0
        %1300 = vmatpush1.msra.mxu0 0.0
        %1301 = vmatprep.subr.mxu0 0.0
        %1302 = vmatpush1.msra.mxu0 0.0
        %1303 = vmatprep.subr.mxu0 0.0
        %1304 = vmatpush1.msra.mxu0 0.0
        %1305 = vmatprep.subr.mxu0 0.0
        %1306 = vmatpush1.msra.mxu0 0.0
        %1307 = vmatprep.subr.mxu0 0.0
        %1308 = vmatpush1.msra.mxu0 0.0
        %1309 = vmatprep.subr.mxu0 0.0
        %1310 = vmatpush1.msra.mxu0 0.0
        %1311 = vmatprep.subr.mxu0 0.0
        %1312 = vmatpush1.msra.mxu0 0.0
        %1313 = vmatprep.subr.mxu0 0.0
        %1314 = vmatpush1.msra.mxu0 0.0
        %1315 = vmatprep.subr.mxu0 0.0
        %1316 = vmatpush1.msra.mxu0 0.0
        %1317 = vmatprep.subr.mxu0 0.0
        %1318 = vmatpush1.msra.mxu0 0.0
        %1319 = vmatprep.subr.mxu0 0.0
        %1320 = vmatpush1.msra.mxu0 0.0
        %1321 = vmatprep.subr.mxu0 0.0
        %1322 = vmatpush1.msra.mxu0 %v1146
        %1323 = vmatprep.subr.mxu0 0.0
        %1324 = vmatpush2.msra.mxu0 0.0
        %1325 = vmatprep.subr.mxu0 0.0
        %1326 = vmatpush2.msra.mxu0 0.0
        %1327 = vmatprep.subr.mxu0 0.0
        %1328 = vmatpush2.msra.mxu0 0.0
        %1329 = vmatprep.subr.mxu0 0.0
        %1330 = vmatpush2.msra.mxu0 0.0
        %1331 = vmatprep.subr.mxu0 0.0
        %1332 = vmatpush2.msra.mxu0 0.0
        %1333 = vmatprep.subr.mxu0 0.0
        %1334 = vmatpush2.msra.mxu0 0.0
        %1335 = vmatprep.subr.mxu0 0.0
        %1336 = vmatpush2.msra.mxu0 0.0
        %1337 = vmatprep.subr.mxu0 0.0
        %1338 = vmatpush2.msra.mxu0 0.0
        %1339 = vmatprep.subr.mxu0 0.0
        %1340 = vmatpush2.msra.mxu0 0.0
        %1341 = vmatprep.subr.mxu0 0.0
        %1342 = vmatpush2.msra.mxu0 0.0
        %1343 = vmatprep.subr.mxu0 0.0
        %1344 = vmatpush2.msra.mxu0 0.0
        %1345 = vmatprep.subr.mxu0 0.0
        %1346 = vmatpush2.msra.mxu0 0.0
        %1347 = vmatprep.subr.mxu0 0.0
        %1348 = vmatpush2.msra.mxu0 0.0
        %1349 = vmatprep.subr.mxu0 0.0
        %1350 = vmatpush2.msra.mxu0 0.0
        %1351 = vmatprep.subr.mxu0 0.0
        %1352 = vmatpush2.msra.mxu0 0.0
        %1353 = vmatprep.subr.mxu0 0.0
        %1354 = vmatpush2.msra.mxu0 0.0
        %1355 = vmatprep.mubr.f32.mxu0 0.0
        %1356 = vmatmul.mubr.f32.gmra.mxu0 %v1289
        %v1357 = vpop.f32.mrf.mxu0
        %v1358 = vadd.f32 0.0, %v1357
        %v1359 = vpop.f32.mrf.mxu0
        %1360 = vdwg.mxu0
        %v1361 = vpack.c.bf16 %v1358, %v1358
        %v1362 = vpack.c.bf16 %v1213, %v1213
        %v1364 = vsel %vm726, %v1361, 0
        %v1367 = vsel %vm726, %v1362, 0
        %1369 = vmatprep.subr.bf16.mxu0 0
        %1370 = vmatpush1.bf16.xpose.msra.mxu0 0
        %1371 = vmatprep.subr.bf16.mxu0 0
        %1372 = vmatpush1.bf16.xpose.msra.mxu0 0
        %1373 = vmatprep.subr.bf16.mxu0 0
        %1374 = vmatpush1.bf16.xpose.msra.mxu0 0
        %1375 = vmatprep.subr.bf16.mxu0 0
        %1376 = vmatpush1.bf16.xpose.msra.mxu0 0
        %1377 = vmatprep.subr.bf16.mxu0 0
        %1378 = vmatpush1.bf16.xpose.msra.mxu0 0
        %1379 = vmatprep.subr.bf16.mxu0 0
        %1380 = vmatpush1.bf16.xpose.msra.mxu0 0
        %1381 = vmatprep.subr.bf16.mxu0 0
        %1382 = vmatpush1.bf16.xpose.msra.mxu0 0
        %1383 = vmatprep.subr.bf16.mxu0 0
        %1384 = vmatpush1.bf16.xpose.msra.mxu0 %v1367
        %1385 = vmatprep.subr.bf16.mxu0 0
        %1386 = vmatpush2.bf16.xpose.msra.mxu0 0
        %1387 = vmatprep.subr.bf16.mxu0 0
        %1388 = vmatpush2.bf16.xpose.msra.mxu0 0
        %1389 = vmatprep.subr.bf16.mxu0 0
        %1390 = vmatpush2.bf16.xpose.msra.mxu0 0
        %1391 = vmatprep.subr.bf16.mxu0 0
        %1392 = vmatpush2.bf16.xpose.msra.mxu0 0
        %1393 = vmatprep.subr.bf16.mxu0 0
        %1394 = vmatpush2.bf16.xpose.msra.mxu0 0
        %1395 = vmatprep.subr.bf16.mxu0 0
        %1396 = vmatpush2.bf16.xpose.msra.mxu0 0
        %1397 = vmatprep.subr.bf16.mxu0 0
        %1398 = vmatpush2.bf16.xpose.msra.mxu0 0
        %1399 = vmatprep.subr.bf16.mxu0 0
        %1400 = vmatpush2.bf16.xpose.msra.mxu0 0
        %1401 = vmatprep.mubr.bf16.mxu0 0
        %1402 = vmatmul.mubr.bf16.gmra.mxu0 %v1364
        %v1403 = vpop.f32.mrf.mxu0
        %v1404 = vadd.f32 0.0, %v1403
        %v1405 = vpop.f32.mrf.mxu0
        %v1406 = vpop.f32.mrf.mxu0
        %v1407 = vpop.f32.mrf.mxu0
        %1408 = vdwg.mxu0
        %v1409 = vmul.f32 %v1404, 0.17677669
        %vm1410 = vcmp.gt.s32.totalorder %v779, 0
        %v1411 = vsel %vm1410, %v779, 0
        %vm1412 = vcmp.lt.s32.totalorder %v781, 8
        %v1413 = vsel %vm1412, %v781, 8
        %vm1414 = vcmp.ge.s32.totalorder %v777, %v1411
        %vm1415 = vcmp.lt.s32.totalorder %v777, %v1413
        %vm1416 = vmand %vm1414, %vm1415
        %v1417 = vsel %vm1416, %v1409, -1e+30
        %v1418 = vsel %vm794, %v1417, -inf
        %1419 = vmax.xlane.f32.xlu0 %v1418
        %v1420 = vpop.xlane.xlu0 %1419
        %v1421 = vsub.f32 %v1417, %v1420
        %v1422 = vmul.f32 %v1421, 1.442695
        %v1423 = vpow.pop %v1422
        %v1424 = vsel %vm794, %v1423, 0.0
        %1425 = vadd.xlane.f32.xlu0 %v1424
        %v1426 = vpop.xlane.xlu0 %1425
        %v1427 = vrcp.pop %v1426
        %v1428 = vmul.f32 %v1423, %v1427
        %v1429 = vpack.c.bf16 %v1428, %v1428
        %v1430 = vpack.c.bf16 %v1280, %v1280
        %v1432 = vsel %vm794, %v1429, 0
        %vm1434 = vcmask 1043456
        %v1436 = vsel %vm1434, %v1430, 0
        %1438 = vmatprep.subr.bf16.mxu0 0
        %1439 = vmatpush1.bf16.msra.mxu0 0
        %1440 = vmatprep.subr.bf16.mxu0 0
        %1441 = vmatpush1.bf16.msra.mxu0 0
        %1442 = vmatprep.subr.bf16.mxu0 0
        %1443 = vmatpush1.bf16.msra.mxu0 0
        %1444 = vmatprep.subr.bf16.mxu0 0
        %1445 = vmatpush1.bf16.msra.mxu0 0
        %1446 = vmatprep.subr.bf16.mxu0 0
        %1447 = vmatpush1.bf16.msra.mxu0 0
        %1448 = vmatprep.subr.bf16.mxu0 0
        %1449 = vmatpush1.bf16.msra.mxu0 0
        %1450 = vmatprep.subr.bf16.mxu0 0
        %1451 = vmatpush1.bf16.msra.mxu0 0
        %1452 = vmatprep.subr.bf16.mxu0 0
        %1453 = vmatpush1.bf16.msra.mxu0 %v1436
        %1454 = vmatprep.subr.bf16.mxu0 0
        %1455 = vmatpush2.bf16.msra.mxu0 0
        %1456 = vmatprep.subr.bf16.mxu0 0
        %1457 = vmatpush2.bf16.msra.mxu0 0
        %1458 = vmatprep.subr.bf16.mxu0 0
        %1459 = vmatpush2.bf16.msra.mxu0 0
        %1460 = vmatprep.subr.bf16.mxu0 0
        %1461 = vmatpush2.bf16.msra.mxu0 0
        %1462 = vmatprep.subr.bf16.mxu0 0
        %1463 = vmatpush2.bf16.msra.mxu0 0
        %1464 = vmatprep.subr.bf16.mxu0 0
        %1465 = vmatpush2.bf16.msra.mxu0 0
        %1466 = vmatprep.subr.bf16.mxu0 0
        %1467 = vmatpush2.bf16.msra.mxu0 0
        %1468 = vmatprep.subr.bf16.mxu0 0
        %1469 = vmatpush2.bf16.msra.mxu0 0
        %1470 = vmatprep.mubr.bf16.mxu0 0
        %1471 = vmatmul.mubr.bf16.gmra.mxu0 %v1432
        %v1472 = vpop.f32.mrf.mxu0
        %v1473 = vadd.f32 0.0, %v1472
        %v1474 = vpop.f32.mrf.mxu0
        %v1475 = vpop.f32.mrf.mxu0
        %v1476 = vpop.f32.mrf.mxu0
        %1477 = vdwg.mxu0
        %1479 = vset.pattern.permute.xlu0 0
        %1480 = vperm.xlu0 %1479, %v775
        %v1481 = vpop.permute.xlu0 %1480
        %v1483 = vmul.f32 %v1481, %v1003
        %1484 = vset.pattern.permute.xlu0 1
        %1485 = vperm.xlu0 %1484, %v775
        %v1486 = vpop.permute.xlu0 %1485
        %v1488 = vmul.f32 %v1486, %v1085
        %v1489 = vadd.f32 %v1483, %v1488
        %1490 = vset.pattern.permute.xlu0 2
        %1491 = vperm.xlu0 %1490, %v775
        %v1492 = vpop.permute.xlu0 %1491
        %v1494 = vmul.f32 %v1492, %v1473
        %v1495 = vadd.f32 %v1489, %v1494
        %1496 = vst.msk [vmem:[%s685] sm:$0xff] %vm726, %v1495
        %s1497 = sand.u32 %s422, 1
        %s1498 = scalar_lea.sflag [#allocation4], %s1497
        %s1499 = sand.u32 %s422, 1
        %s1500 = smul.addr %s1499, 8
        %s1501 = scalar_lea.vmem [#allocation14], %s1500
        // Predicated region
        $region117: #{tpu_custom_call.1} parent=87 // pred_check
          %p1502 = pneg %p432
        $region118: #{tpu_custom_call.1} parent=87 // pred_check_branch
          %1504 = sbr.rel (%p1502) target = $region120
        $region119: #{tpu_custom_call.1} parent=87 // pred_region
          %s1506 = ssub.s32 128, 128
          %1507 = vsyncadd %s1498, %s1506
          %s1508 = smul.addr %s37, 128
          %s1509 = scalar_lea.hbm %s17, %s1508
          %s1511 = sshll.u32 %s1501, 4
          %s1512 = int_to_ptr.vmem [resolvable:$true] %s1511
          %1514 = dma.vmem_to_hbm [thread:$0]  %s1512, 128, %s1509, %s1498
        $region120: #{tpu_custom_call.1} parent=87 // pred_fallthru
          _
      $region88: #{tpu_custom_call.1} parent=5 // pred_fallthru
        _
      %p1515 = scmp.le.s32.totalorder 2, %s32
      // Predicated region
      $region121: #{tpu_custom_call.1} parent=5 // pred_check
        %p1516 = pneg %p1515
      $region122: #{tpu_custom_call.1} parent=5 // pred_check_branch
        %1518 = sbr.rel (%p1516) target = $region124
      $region123: #{tpu_custom_call.1} parent=5 // pred_region
        %s1519 = ssub.s32 %s32, 2
        // Predicated region
        $region125: #{tpu_custom_call.1} parent=123 // pred_check
          %p1520 = pneg %p438
        $region126: #{tpu_custom_call.1} parent=123 // pred_check_branch
          %1522 = sbr.rel (%p1520) target = $region128
        $region127: #{tpu_custom_call.1} parent=123 // pred_region
          %s1523 = sand.u32 %s423, 1
          %s1524 = scalar_lea.sflag [#allocation4], %s1523
          %s1525 = sand.u32 %s423, 1
          %s1526 = smul.addr %s1525, 8
          %s1527 = scalar_lea.vmem [#allocation14], %s1526
          %1528 = dma.done %s1524, 128
        $region128: #{tpu_custom_call.1} parent=123 // pred_fallthru
          _
      $region124: #{tpu_custom_call.1} parent=5 // pred_fallthru
        _
    $region6: #{tpu_custom_call.1} parent=1 // loop_footer
      %s36 = sadd.s32 1, %s32
    $region7: #{tpu_custom_call.1} parent=1 // loop_footer_branch
      %31 = sbr.rel target = $region3
    $region8: #{tpu_custom_call.1} parent=1 // loop_exit
      _
    %1529 = vsyncpa [#allocation3], 1
    %s1530 = scalar_lea.sflag [#allocation3], 1
    %1531 = vsyncpa %s1530, 1
    %1532 = vsyncpa [#allocation6], 1
    %1533 = vsyncpa [#allocation9], 1
    %1534 = vsyncpa [#allocation12], 1
    %1535 = vsyncpa [#allocation4], 1
    %s1536 = scalar_lea.sflag [#allocation4], 1
    %1537 = vsyncpa %s1536, 1

</llo_original>
